<compile_context>
chip_gen: v7x
topology: tpu7x:2x2x1
jax: 0.10.0
libtpu: 0.0.40
codegen_flags: <defaults>
</compile_context>

<pallas_src>
import functools

import jax
import jax.numpy as jnp
from jax import lax
from jax.experimental import pallas as pl
from jax.experimental.pallas import tpu as pltpu

# ----------------------------- hyper-parameters -----------------------------
INPUT_NOISE = 0.4      # salt-and-pepper probability on the visible input
HIDDEN_NOISE = 2.0     # gaussian std added to (non-h1) hidden layers
NOISELESS_H1 = True
INPUT_SAMPLING = True  # sampled visible is discarded by forward (see header)


# ------------------------------- Pallas kernel ------------------------------
def gsn_kernel(xs_ref, u1_ref, u2_ref, g2_ref,
               we0_ref, wd1_ref, we1_ref, wd0_ref,
               benc_ref, be1_ref, bd0_ref,
               out_ref, h2_ref, xpart_ref, *, input_noise, hidden_noise):
    """One (batch-chunk, time-chunk) grid step.

    xs/u1/u2 : (TC, BC, V)  f32   inputs / uniform noise
    g2       : (TC, BC, H2) f32   standard normal hidden noise
    we0      : (V,  H1) bf16   We0^T        wd1 : (H2, H1) bf16   Wd1^T
    we1      : (H1, H2) bf16   We1^T        wd0 : (H1, V)  bf16   Wd0^T
    benc     : (1, H1) f32  be0+bd1    be1 : (1, H2) f32    bd0 : (1, V) f32
    out      : (TC, BC, V)  f32   reconstructions
    h2_ref   : (BC, H2)     f32   scratch: hidden state carried across T chunks
    xpart_ref: (TC, BC, H1) f32   scratch: hoisted x-part of the encode preact
    """
    TC, BC, V = xs_ref.shape
    H1 = we0_ref.shape[1]
    H2 = wd1_ref.shape[0]

    # init_hiddens: zeros at the start of each sequence (time-chunk 0).
    @pl.when(pl.program_id(1) == 0)
    def _():
        h2_ref[...] = jnp.zeros_like(h2_ref)

    # ---- hoisted, time-parallel half of encode (whole chunk at once) ----
    x = xs_ref[...]                                        # (TC, BC, V) f32
    salt = (u2_ref[...] < 0.5).astype(x.dtype)             # salt vs pepper
    x_c = jnp.where(u1_ref[...] < input_noise, salt, x)    # corrupted visible
    # Fold time into the row dim: (TC*BC, V) -- fills sublanes & MXU rows.
    x_c2 = x_c.reshape(TC * BC, V).astype(jnp.bfloat16)
    xpart = jnp.dot(x_c2, we0_ref[...],
                    preferred_element_type=jnp.float32) + benc_ref[...]
    xpart_ref[...] = xpart.reshape(TC, BC, H1)

    # Load weights once; hoist bias broadcasts out of the recurrence.
    wd1 = wd1_ref[...]                                     # (H2, H1) bf16
    we1 = we1_ref[...]                                     # (H1, H2) bf16
    wd0 = wd0_ref[...]                                     # (H1, V)  bf16
    be1 = jnp.broadcast_to(be1_ref[...], (BC, H2))         # f32
    bd0 = jnp.broadcast_to(bd0_ref[...], (BC, V))          # f32

    # TODO(synk): u1/u2/g2 could be generated on-chip with pltpu.prng_seed +
    # pltpu.prng_random_bits / stateful_normal to drop 3 HBM streams; kept
    # streamed so outputs stay bit-comparable to host-generated noise.

    # ---- serial recurrence over the time chunk (only h2 carries) ----
    def step(t, h2):
        pre1 = xpart_ref[t] + jnp.dot(h2.astype(jnp.bfloat16), wd1,
                                      preferred_element_type=jnp.float32)
        h1 = jnp.maximum(pre1, 0.0)                        # ReLU (noiseless_h1)
        h1b = h1.astype(jnp.bfloat16)
        # decode: two independent matmuls, both landing at lane offset 0
        h2_pre = jnp.dot(h1b, we1, preferred_element_type=jnp.float32) + be1
        x_rec = jax.nn.sigmoid(
            jnp.dot(h1b, wd0, preferred_element_type=jnp.float32) + bd0)
        out_ref[t] = x_rec.astype(out_ref.dtype)           # lane-aligned store
        return jnp.maximum(h2_pre, 0.0) + hidden_noise * g2_ref[t]

    h2_ref[...] = lax.fori_loop(0, TC, step, h2_ref[...], unroll=True)


# --------------------------------- wrapper ----------------------------------
def _round_up(n, m):
    return ((n + m - 1) // m) * m


def _pad_tb(a, t_pad, b_pad):
    t, b = a.shape[0], a.shape[1]
    if t == t_pad and b == b_pad:
        return a
    pad = [(0, t_pad - t), (0, b_pad - b)] + [(0, 0)] * (a.ndim - 2)
    return jnp.pad(a, pad)


@functools.partial(jax.jit, static_argnames=("sizes", "b_chunk", "t_chunk"))
def untied_gsn_forward(xs, params, noise, sizes, *, b_chunk=None, t_chunk=None):
    """xs: [T, B, V] float32. Returns predictions: [T, B, V] float32."""
    T, B, V = xs.shape
    H1, H2 = sizes[1], sizes[2]
    u1, u2, g2 = noise

    # ---- padding / chunking (rows = multiple of 8 sublanes) ----
    B8 = _round_up(B, 8)
    if b_chunk is None:
        # Split batch into two chunks when big enough (feeds v7x's 2nd TC).
        b_chunk = B8 // 2 if (B8 >= 16 and (B8 // 2) % 8 == 0) else B8
    else:
        b_chunk = _round_up(b_chunk, 8)
    B_pad = _round_up(B8, b_chunk)

    if t_chunk is None:
        t_chunk = min(T, 8)
    T_pad = _round_up(T, t_chunk)

    xs = _pad_tb(xs, T_pad, B_pad)
    u1 = _pad_tb(u1, T_pad, B_pad)
    u2 = _pad_tb(u2, T_pad, B_pad)
    g2 = _pad_tb(g2, T_pad, B_pad)

    # ---- weight / bias packing (nn.Linear [out,in] -> [in,out], bf16) ----
    we0 = params["We0"].T.astype(jnp.bfloat16)             # (V,  H1)
    wd1 = params["Wd1"].T.astype(jnp.bfloat16)             # (H2, H1)
    we1 = params["We1"].T.astype(jnp.bfloat16)             # (H1, H2)
    wd0 = params["Wd0"].T.astype(jnp.bfloat16)             # (H1, V)
    benc = (params["be0"] + params["bd1"]).reshape(1, H1).astype(jnp.float32)
    be1 = params["be1"].reshape(1, H2).astype(jnp.float32)
    bd0 = params["bd0"].reshape(1, V).astype(jnp.float32)

    nb = B_pad // b_chunk
    nt = T_pad // t_chunk

    def seq_spec(last):
        return pl.BlockSpec((t_chunk, b_chunk, last), lambda bi, ti: (ti, bi, 0))

    def resident_spec(shape):
        return pl.BlockSpec(shape, lambda bi, ti, _s=shape: (0,) * len(_s))

    out = pl.pallas_call(
        functools.partial(gsn_kernel,
                          input_noise=INPUT_NOISE,
                          hidden_noise=HIDDEN_NOISE),
        out_shape=jax.ShapeDtypeStruct((T_pad, B_pad, V), jnp.float32),
        grid_spec=pltpu.PrefetchScalarGridSpec(
            num_scalar_prefetch=0,
            grid=(nb, nt),
            in_specs=[seq_spec(V), seq_spec(V), seq_spec(V), seq_spec(H2),
                      resident_spec((V, H1)), resident_spec((H2, H1)),
                      resident_spec((H1, H2)), resident_spec((H1, V)),
                      resident_spec((1, H1)), resident_spec((1, H2)),
                      resident_spec((1, V))],
            out_specs=seq_spec(V),
            scratch_shapes=[pltpu.VMEM((b_chunk, H2), jnp.float32),
                            pltpu.VMEM((t_chunk, b_chunk, H1), jnp.float32)]),
        compiler_params=pltpu.CompilerParams(
            dimension_semantics=("parallel", "arbitrary"),
            vmem_limit_bytes=64 * 1024 * 1024),
    )(xs, u1, u2, g2, we0, wd1, we1, wd0, benc, be1, bd0)

    return out[:T, :B, :]


def init_params(key, sizes):
    """Deterministic nn.Linear-style init: U(-1/sqrt(fan_in), 1/sqrt(fan_in))."""
    V, H1, H2 = sizes

    def lin(k, out_f, in_f):
        kw, kb = jax.random.split(k)
        bound = 1.0 / jnp.sqrt(in_f)
        w = jax.random.uniform(kw, (out_f, in_f), jnp.float32, -bound, bound)
        b = jax.random.uniform(kb, (out_f,), jnp.float32, -bound, bound)
        return w, b

    k = jax.random.split(key, 4)
    We0, be0 = lin(k[0], H1, V)    # encode layer 0: V  -> H1
    We1, be1 = lin(k[1], H2, H1)   # encode layer 1: H1 -> H2
    Wd0, bd0 = lin(k[2], V, H1)    # decode layer 0: H1 -> V   (untied)
    Wd1, bd1 = lin(k[3], H1, H2)   # decode layer 1: H2 -> H1  (untied)
    return dict(We0=We0, be0=be0, We1=We1, be1=be1,
                Wd0=Wd0, bd0=bd0, Wd1=Wd1, bd1=bd1)


if __name__ == "__main__":
    sizes = (32, 64, 32)            # (visible, h1, h2)
    T, B = 8, 4
    V, H1, H2 = sizes

    key = jax.random.PRNGKey(0)
    k_x, k_p, k_u1, k_u2, k_g2 = jax.random.split(key, 5)

    xs = jax.random.uniform(k_x, (T, B, V), jnp.float32)        # layout: [T, B, V]
    params = init_params(k_p, sizes)
    noise = (
        jax.random.uniform(k_u1, (T, B, V), jnp.float32),        # corruption mask
        jax.random.uniform(k_u2, (T, B, V), jnp.float32),        # salt/pepper values
        jax.random.normal(k_g2, (T, B, H2), jnp.float32),        # hidden gaussian noise
    )

    # t_chunk=4 -> 2 time-chunks: exercises the h2 carry across grid steps.
    preds = untied_gsn_forward(xs, params, noise, sizes, t_chunk=4)
    preds = jax.block_until_ready(preds)

    assert preds.shape == (T, B, V)
    assert bool(jnp.all(jnp.isfinite(preds)))
    assert bool(jnp.all((preds >= 0.0) & (preds <= 1.0)))        # sigmoid output
    print("KERNEL_OK")
</pallas_src>

<mosaic_0001>
module attributes {stable_mosaic.version = 11 : i64} {
  func.func @gsn_kernel(%arg0: i32, %arg1: i32, %arg2: memref<4x8x32xf32, #tpu.memory_space<vmem>>, %arg3: memref<4x8x32xf32, #tpu.memory_space<vmem>>, %arg4: memref<4x8x32xf32, #tpu.memory_space<vmem>>, %arg5: memref<4x8x32xf32, #tpu.memory_space<vmem>>, %arg6: memref<32x64xbf16, #tpu.memory_space<vmem>>, %arg7: memref<32x64xbf16, #tpu.memory_space<vmem>>, %arg8: memref<64x32xbf16, #tpu.memory_space<vmem>>, %arg9: memref<64x32xbf16, #tpu.memory_space<vmem>>, %arg10: memref<1x64xf32, #tpu.memory_space<vmem>>, %arg11: memref<1x32xf32, #tpu.memory_space<vmem>>, %arg12: memref<1x32xf32, #tpu.memory_space<vmem>>, %arg13: memref<4x8x32xf32, #tpu.memory_space<vmem>>, %arg14: memref<8x32xf32, #tpu.memory_space<vmem>>, %arg15: memref<4x8x64xf32, #tpu.memory_space<vmem>>) attributes {dimension_semantics = [#tpu.dimension_semantics<parallel>, #tpu.dimension_semantics<arbitrary>], iteration_bounds = array<i64: 1, 2>, scalar_prefetch = 0 : i64, scratch_operands = 2 : i64, tpu.core_type = #tpu.core_type<tc>, window_params = [{transform_indices = @transform_0, window_bounds = array<i64: 4, 8, 32>}, {transform_indices = @transform_1, window_bounds = array<i64: 4, 8, 32>}, {transform_indices = @transform_2, window_bounds = array<i64: 4, 8, 32>}, {transform_indices = @transform_3, window_bounds = array<i64: 4, 8, 32>}, {pipeline_mode = #tpu.pipeline_mode<synchronous>, transform_indices = @transform_4, window_bounds = array<i64: 32, 64>}, {pipeline_mode = #tpu.pipeline_mode<synchronous>, transform_indices = @transform_5, window_bounds = array<i64: 32, 64>}, {pipeline_mode = #tpu.pipeline_mode<synchronous>, transform_indices = @transform_6, window_bounds = array<i64: 64, 32>}, {pipeline_mode = #tpu.pipeline_mode<synchronous>, transform_indices = @transform_7, window_bounds = array<i64: 64, 32>}, {pipeline_mode = #tpu.pipeline_mode<synchronous>, transform_indices = @transform_8, window_bounds = array<i64: 1, 64>}, {pipeline_mode = #tpu.pipeline_mode<synchronous>, transform_indices = @transform_9, window_bounds = array<i64: 1, 32>}, {pipeline_mode = #tpu.pipeline_mode<synchronous>, transform_indices = @transform_10, window_bounds = array<i64: 1, 32>}, {transform_indices = @transform_11, window_bounds = array<i64: 4, 8, 32>}]} {
    %c0_i32 = arith.constant 0 : i32
    %0 = arith.cmpi eq, %arg1, %c0_i32 : i32
    %1 = arith.extui %0 : i1 to i32
    %c0_i32_0 = arith.constant 0 : i32
    %2 = arith.cmpi ne, %1, %c0_i32_0 : i32
    scf.if %2 {
      %cst_85 = arith.constant 0.000000e+00 : f32
      %153 = vector.broadcast %cst_85 : f32 to vector<8x32xf32>
      %c0_86 = arith.constant 0 : index
      %c0_87 = arith.constant 0 : index
      %154 = vector.load %arg14[%c0_86, %c0_87] : memref<8x32xf32, #tpu.memory_space<vmem>>, vector<8x32xf32>
      tpu.vector_store %arg14[%c0_86, %c0_87], %153 {strides = array<i32>} : memref<8x32xf32, #tpu.memory_space<vmem>>, vector<8x32xf32>,
    } else {
    }
    %c0 = arith.constant 0 : index
    %c0_1 = arith.constant 0 : index
    %c0_2 = arith.constant 0 : index
    %3 = vector.load %arg2[%c0, %c0_1, %c0_2] : memref<4x8x32xf32, #tpu.memory_space<vmem>>, vector<4x8x32xf32>
    %c0_3 = arith.constant 0 : index
    %c0_4 = arith.constant 0 : index
    %c0_5 = arith.constant 0 : index
    %4 = vector.load %arg4[%c0_3, %c0_4, %c0_5] : memref<4x8x32xf32, #tpu.memory_space<vmem>>, vector<4x8x32xf32>
    %cst = arith.constant 5.000000e-01 : f32
    %5 = vector.broadcast %cst : f32 to vector<4x8x32xf32>
    %6 = arith.cmpf olt, %4, %5 : vector<4x8x32xf32>
    %7 = arith.extui %6 : vector<4x8x32xi1> to vector<4x8x32xi32>
    %8 = arith.sitofp %7 : vector<4x8x32xi32> to vector<4x8x32xf32>
    %c0_6 = arith.constant 0 : index
    %c0_7 = arith.constant 0 : index
    %c0_8 = arith.constant 0 : index
    %9 = vector.load %arg3[%c0_6, %c0_7, %c0_8] : memref<4x8x32xf32, #tpu.memory_space<vmem>>, vector<4x8x32xf32>
    %cst_9 = arith.constant 4.000000e-01 : f32
    %10 = vector.broadcast %cst_9 : f32 to vector<4x8x32xf32>
    %11 = arith.cmpf olt, %9, %10 : vector<4x8x32xf32>
    %12 = arith.select %11, %8, %3 : vector<4x8x32xi1>, vector<4x8x32xf32>
    %13 = vector.shape_cast %12 : vector<4x8x32xf32> to vector<32x32xf32>
    %14 = arith.truncf %13 : vector<32x32xf32> to vector<32x32xbf16>
    %c0_10 = arith.constant 0 : index
    %c0_11 = arith.constant 0 : index
    %15 = vector.load %arg6[%c0_10, %c0_11] : memref<32x64xbf16, #tpu.memory_space<vmem>>, vector<32x64xbf16>
    %cst_12 = arith.constant dense<0.000000e+00> : vector<32x64xf32>
    %16 = tpu.matmul %14, %15, %cst_12 {dimension_numbers = #tpu.dot_dimension_numbers<[1], [0], [0], [1], [0, 0, 1, 1], [], []>} : vector<32x32xbf16>, vector<32x64xbf16>, vector<32x64xf32> -> vector<32x64xf32>
    %c0_13 = arith.constant 0 : index
    %c0_14 = arith.constant 0 : index
    %17 = vector.load %arg10[%c0_13, %c0_14] : memref<1x64xf32, #tpu.memory_space<vmem>>, vector<1x64xf32>
    %18 = vector.broadcast %17 : vector<1x64xf32> to vector<32x64xf32>
    %19 = arith.addf %16, %18 : vector<32x64xf32>
    %20 = vector.shape_cast %19 : vector<32x64xf32> to vector<4x8x64xf32>
    %c0_15 = arith.constant 0 : index
    %c0_16 = arith.constant 0 : index
    %c0_17 = arith.constant 0 : index
    %21 = vector.load %arg15[%c0_15, %c0_16, %c0_17] : memref<4x8x64xf32, #tpu.memory_space<vmem>>, vector<4x8x64xf32>
    tpu.vector_store %arg15[%c0_15, %c0_16, %c0_17], %20 {strides = array<i32>} : memref<4x8x64xf32, #tpu.memory_space<vmem>>, vector<4x8x64xf32>,
    %c0_18 = arith.constant 0 : index
    %c0_19 = arith.constant 0 : index
    %22 = vector.load %arg7[%c0_18, %c0_19] : memref<32x64xbf16, #tpu.memory_space<vmem>>, vector<32x64xbf16>
    %c0_20 = arith.constant 0 : index
    %c0_21 = arith.constant 0 : index
    %23 = vector.load %arg8[%c0_20, %c0_21] : memref<64x32xbf16, #tpu.memory_space<vmem>>, vector<64x32xbf16>
    %c0_22 = arith.constant 0 : index
    %c0_23 = arith.constant 0 : index
    %24 = vector.load %arg9[%c0_22, %c0_23] : memref<64x32xbf16, #tpu.memory_space<vmem>>, vector<64x32xbf16>
    %c0_24 = arith.constant 0 : index
    %c0_25 = arith.constant 0 : index
    %25 = vector.load %arg11[%c0_24, %c0_25] : memref<1x32xf32, #tpu.memory_space<vmem>>, vector<1x32xf32>
    %26 = vector.shape_cast %25 : vector<1x32xf32> to vector<1x32xf32>
    %27 = vector.broadcast %26 : vector<1x32xf32> to vector<8x32xf32>
    %c0_26 = arith.constant 0 : index
    %c0_27 = arith.constant 0 : index
    %28 = vector.load %arg12[%c0_26, %c0_27] : memref<1x32xf32, #tpu.memory_space<vmem>>, vector<1x32xf32>
    %29 = vector.shape_cast %28 : vector<1x32xf32> to vector<1x32xf32>
    %30 = vector.broadcast %29 : vector<1x32xf32> to vector<8x32xf32>
    %c0_28 = arith.constant 0 : index
    %c0_29 = arith.constant 0 : index
    %31 = vector.load %arg14[%c0_28, %c0_29] : memref<8x32xf32, #tpu.memory_space<vmem>>, vector<8x32xf32>
    %c0_i32_30 = arith.constant 0 : i32
    %32 = arith.index_cast %c0_i32_30 : i32 to index
    %c0_31 = arith.constant 0 : index
    %c0_32 = arith.constant 0 : index
    %33 = vector.load %arg15[%32, %c0_31, %c0_32] : memref<4x8x64xf32, #tpu.memory_space<vmem>>, vector<1x8x64xf32>
    %34 = vector.shape_cast %33 : vector<1x8x64xf32> to vector<8x64xf32>
    %35 = arith.truncf %31 : vector<8x32xf32> to vector<8x32xbf16>
    %cst_33 = arith.constant dense<0.000000e+00> : vector<8x64xf32>
    %36 = tpu.matmul %35, %22, %cst_33 {dimension_numbers = #tpu.dot_dimension_numbers<[1], [0], [0], [1], [0, 0, 1, 1], [], []>} : vector<8x32xbf16>, vector<32x64xbf16>, vector<8x64xf32> -> vector<8x64xf32>
    %37 = arith.addf %34, %36 : vector<8x64xf32>
    %cst_34 = arith.constant 0.000000e+00 : f32
    %38 = vector.broadcast %cst_34 : f32 to vector<8x64xf32>
    %39 = arith.maximumf %37, %38 : vector<8x64xf32>
    %40 = arith.truncf %39 : vector<8x64xf32> to vector<8x64xbf16>
    %cst_35 = arith.constant dense<0.000000e+00> : vector<8x32xf32>
    %41 = tpu.matmul %40, %23, %cst_35 {dimension_numbers = #tpu.dot_dimension_numbers<[1], [0], [0], [1], [0, 0, 1, 1], [], []>} : vector<8x64xbf16>, vector<64x32xbf16>, vector<8x32xf32> -> vector<8x32xf32>
    %42 = arith.addf %41, %27 : vector<8x32xf32>
    %cst_36 = arith.constant dense<0.000000e+00> : vector<8x32xf32>
    %43 = tpu.matmul %40, %24, %cst_36 {dimension_numbers = #tpu.dot_dimension_numbers<[1], [0], [0], [1], [0, 0, 1, 1], [], []>} : vector<8x64xbf16>, vector<64x32xbf16>, vector<8x32xf32> -> vector<8x32xf32>
    %44 = arith.addf %43, %30 : vector<8x32xf32>
    %45 = arith.negf %44 : vector<8x32xf32>
    %46 = math.exp %45 : vector<8x32xf32>
    %cst_37 = arith.constant 1.000000e+00 : f32
    %47 = vector.broadcast %cst_37 : f32 to vector<8x32xf32>
    %48 = arith.addf %47, %46 : vector<8x32xf32>
    %49 = arith.divf %47, %48 : vector<8x32xf32>
    %50 = arith.index_cast %c0_i32_30 : i32 to index
    %c0_38 = arith.constant 0 : index
    %c0_39 = arith.constant 0 : index
    %51 = vector.load %arg13[%50, %c0_38, %c0_39] : memref<4x8x32xf32, #tpu.memory_space<vmem>>, vector<1x8x32xf32>
    %52 = vector.shape_cast %51 : vector<1x8x32xf32> to vector<8x32xf32>
    %53 = vector.shape_cast %49 : vector<8x32xf32> to vector<1x8x32xf32>
    tpu.vector_store %arg13[%50, %c0_38, %c0_39], %53 {strides = array<i32>} : memref<4x8x32xf32, #tpu.memory_space<vmem>>, vector<1x8x32xf32>,
    %cst_40 = arith.constant 0.000000e+00 : f32
    %54 = vector.broadcast %cst_40 : f32 to vector<8x32xf32>
    %55 = arith.maximumf %42, %54 : vector<8x32xf32>
    %56 = arith.index_cast %c0_i32_30 : i32 to index
    %c0_41 = arith.constant 0 : index
    %c0_42 = arith.constant 0 : index
    %57 = vector.load %arg5[%56, %c0_41, %c0_42] : memref<4x8x32xf32, #tpu.memory_space<vmem>>, vector<1x8x32xf32>
    %58 = vector.shape_cast %57 : vector<1x8x32xf32> to vector<8x32xf32>
    %cst_43 = arith.constant 2.000000e+00 : f32
    %59 = vector.broadcast %cst_43 : f32 to vector<8x32xf32>
    %60 = arith.mulf %59, %58 : vector<8x32xf32>
    %61 = arith.addf %55, %60 : vector<8x32xf32>
    %c1_i32 = arith.constant 1 : i32
    %62 = arith.index_cast %c1_i32 : i32 to index
    %c0_44 = arith.constant 0 : index
    %c0_45 = arith.constant 0 : index
    %63 = vector.load %arg15[%62, %c0_44, %c0_45] : memref<4x8x64xf32, #tpu.memory_space<vmem>>, vector<1x8x64xf32>
    %64 = vector.shape_cast %63 : vector<1x8x64xf32> to vector<8x64xf32>
    %65 = arith.truncf %61 : vector<8x32xf32> to vector<8x32xbf16>
    %cst_46 = arith.constant dense<0.000000e+00> : vector<8x64xf32>
    %66 = tpu.matmul %65, %22, %cst_46 {dimension_numbers = #tpu.dot_dimension_numbers<[1], [0], [0], [1], [0, 0, 1, 1], [], []>} : vector<8x32xbf16>, vector<32x64xbf16>, vector<8x64xf32> -> vector<8x64xf32>
    %67 = arith.addf %64, %66 : vector<8x64xf32>
    %cst_47 = arith.constant 0.000000e+00 : f32
    %68 = vector.broadcast %cst_47 : f32 to vector<8x64xf32>
    %69 = arith.maximumf %67, %68 : vector<8x64xf32>
    %70 = arith.truncf %69 : vector<8x64xf32> to vector<8x64xbf16>
    %cst_48 = arith.constant dense<0.000000e+00> : vector<8x32xf32>
    %71 = tpu.matmul %70, %23, %cst_48 {dimension_numbers = #tpu.dot_dimension_numbers<[1], [0], [0], [1], [0, 0, 1, 1], [], []>} : vector<8x64xbf16>, vector<64x32xbf16>, vector<8x32xf32> -> vector<8x32xf32>
    %72 = arith.addf %71, %27 : vector<8x32xf32>
    %cst_49 = arith.constant dense<0.000000e+00> : vector<8x32xf32>
    %73 = tpu.matmul %70, %24, %cst_49 {dimension_numbers = #tpu.dot_dimension_numbers<[1], [0], [0], [1], [0, 0, 1, 1], [], []>} : vector<8x64xbf16>, vector<64x32xbf16>, vector<8x32xf32> -> vector<8x32xf32>
    %74 = arith.addf %73, %30 : vector<8x32xf32>
    %75 = arith.negf %74 : vector<8x32xf32>
    %76 = math.exp %75 : vector<8x32xf32>
    %cst_50 = arith.constant 1.000000e+00 : f32
    %77 = vector.broadcast %cst_50 : f32 to vector<8x32xf32>
    %78 = arith.addf %77, %76 : vector<8x32xf32>
    %79 = arith.divf %77, %78 : vector<8x32xf32>
    %80 = arith.index_cast %c1_i32 : i32 to index
    %c0_51 = arith.constant 0 : index
    %c0_52 = arith.constant 0 : index
    %81 = vector.load %arg13[%80, %c0_51, %c0_52] : memref<4x8x32xf32, #tpu.memory_space<vmem>>, vector<1x8x32xf32>
    %82 = vector.shape_cast %81 : vector<1x8x32xf32> to vector<8x32xf32>
    %83 = vector.shape_cast %79 : vector<8x32xf32> to vector<1x8x32xf32>
    tpu.vector_store %arg13[%80, %c0_51, %c0_52], %83 {strides = array<i32>} : memref<4x8x32xf32, #tpu.memory_space<vmem>>, vector<1x8x32xf32>,
    %cst_53 = arith.constant 0.000000e+00 : f32
    %84 = vector.broadcast %cst_53 : f32 to vector<8x32xf32>
    %85 = arith.maximumf %72, %84 : vector<8x32xf32>
    %86 = arith.index_cast %c1_i32 : i32 to index
    %c0_54 = arith.constant 0 : index
    %c0_55 = arith.constant 0 : index
    %87 = vector.load %arg5[%86, %c0_54, %c0_55] : memref<4x8x32xf32, #tpu.memory_space<vmem>>, vector<1x8x32xf32>
    %88 = vector.shape_cast %87 : vector<1x8x32xf32> to vector<8x32xf32>
    %cst_56 = arith.constant 2.000000e+00 : f32
    %89 = vector.broadcast %cst_56 : f32 to vector<8x32xf32>
    %90 = arith.mulf %89, %88 : vector<8x32xf32>
    %91 = arith.addf %85, %90 : vector<8x32xf32>
    %c2_i32 = arith.constant 2 : i32
    %92 = arith.index_cast %c2_i32 : i32 to index
    %c0_57 = arith.constant 0 : index
    %c0_58 = arith.constant 0 : index
    %93 = vector.load %arg15[%92, %c0_57, %c0_58] : memref<4x8x64xf32, #tpu.memory_space<vmem>>, vector<1x8x64xf32>
    %94 = vector.shape_cast %93 : vector<1x8x64xf32> to vector<8x64xf32>
    %95 = arith.truncf %91 : vector<8x32xf32> to vector<8x32xbf16>
    %cst_59 = arith.constant dense<0.000000e+00> : vector<8x64xf32>
    %96 = tpu.matmul %95, %22, %cst_59 {dimension_numbers = #tpu.dot_dimension_numbers<[1], [0], [0], [1], [0, 0, 1, 1], [], []>} : vector<8x32xbf16>, vector<32x64xbf16>, vector<8x64xf32> -> vector<8x64xf32>
    %97 = arith.addf %94, %96 : vector<8x64xf32>
    %cst_60 = arith.constant 0.000000e+00 : f32
    %98 = vector.broadcast %cst_60 : f32 to vector<8x64xf32>
    %99 = arith.maximumf %97, %98 : vector<8x64xf32>
    %100 = arith.truncf %99 : vector<8x64xf32> to vector<8x64xbf16>
    %cst_61 = arith.constant dense<0.000000e+00> : vector<8x32xf32>
    %101 = tpu.matmul %100, %23, %cst_61 {dimension_numbers = #tpu.dot_dimension_numbers<[1], [0], [0], [1], [0, 0, 1, 1], [], []>} : vector<8x64xbf16>, vector<64x32xbf16>, vector<8x32xf32> -> vector<8x32xf32>
    %102 = arith.addf %101, %27 : vector<8x32xf32>
    %cst_62 = arith.constant dense<0.000000e+00> : vector<8x32xf32>
    %103 = tpu.matmul %100, %24, %cst_62 {dimension_numbers = #tpu.dot_dimension_numbers<[1], [0], [0], [1], [0, 0, 1, 1], [], []>} : vector<8x64xbf16>, vector<64x32xbf16>, vector<8x32xf32> -> vector<8x32xf32>
    %104 = arith.addf %103, %30 : vector<8x32xf32>
    %105 = arith.negf %104 : vector<8x32xf32>
    %106 = math.exp %105 : vector<8x32xf32>
    %cst_63 = arith.constant 1.000000e+00 : f32
    %107 = vector.broadcast %cst_63 : f32 to vector<8x32xf32>
    %108 = arith.addf %107, %106 : vector<8x32xf32>
    %109 = arith.divf %107, %108 : vector<8x32xf32>
    %110 = arith.index_cast %c2_i32 : i32 to index
    %c0_64 = arith.constant 0 : index
    %c0_65 = arith.constant 0 : index
    %111 = vector.load %arg13[%110, %c0_64, %c0_65] : memref<4x8x32xf32, #tpu.memory_space<vmem>>, vector<1x8x32xf32>
    %112 = vector.shape_cast %111 : vector<1x8x32xf32> to vector<8x32xf32>
    %113 = vector.shape_cast %109 : vector<8x32xf32> to vector<1x8x32xf32>
    tpu.vector_store %arg13[%110, %c0_64, %c0_65], %113 {strides = array<i32>} : memref<4x8x32xf32, #tpu.memory_space<vmem>>, vector<1x8x32xf32>,
    %cst_66 = arith.constant 0.000000e+00 : f32
    %114 = vector.broadcast %cst_66 : f32 to vector<8x32xf32>
    %115 = arith.maximumf %102, %114 : vector<8x32xf32>
    %116 = arith.index_cast %c2_i32 : i32 to index
    %c0_67 = arith.constant 0 : index
    %c0_68 = arith.constant 0 : index
    %117 = vector.load %arg5[%116, %c0_67, %c0_68] : memref<4x8x32xf32, #tpu.memory_space<vmem>>, vector<1x8x32xf32>
    %118 = vector.shape_cast %117 : vector<1x8x32xf32> to vector<8x32xf32>
    %cst_69 = arith.constant 2.000000e+00 : f32
    %119 = vector.broadcast %cst_69 : f32 to vector<8x32xf32>
    %120 = arith.mulf %119, %118 : vector<8x32xf32>
    %121 = arith.addf %115, %120 : vector<8x32xf32>
    %c3_i32 = arith.constant 3 : i32
    %122 = arith.index_cast %c3_i32 : i32 to index
    %c0_70 = arith.constant 0 : index
    %c0_71 = arith.constant 0 : index
    %123 = vector.load %arg15[%122, %c0_70, %c0_71] : memref<4x8x64xf32, #tpu.memory_space<vmem>>, vector<1x8x64xf32>
    %124 = vector.shape_cast %123 : vector<1x8x64xf32> to vector<8x64xf32>
    %125 = arith.truncf %121 : vector<8x32xf32> to vector<8x32xbf16>
    %cst_72 = arith.constant dense<0.000000e+00> : vector<8x64xf32>
    %126 = tpu.matmul %125, %22, %cst_72 {dimension_numbers = #tpu.dot_dimension_numbers<[1], [0], [0], [1], [0, 0, 1, 1], [], []>} : vector<8x32xbf16>, vector<32x64xbf16>, vector<8x64xf32> -> vector<8x64xf32>
    %127 = arith.addf %124, %126 : vector<8x64xf32>
    %cst_73 = arith.constant 0.000000e+00 : f32
    %128 = vector.broadcast %cst_73 : f32 to vector<8x64xf32>
    %129 = arith.maximumf %127, %128 : vector<8x64xf32>
    %130 = arith.truncf %129 : vector<8x64xf32> to vector<8x64xbf16>
    %cst_74 = arith.constant dense<0.000000e+00> : vector<8x32xf32>
    %131 = tpu.matmul %130, %23, %cst_74 {dimension_numbers = #tpu.dot_dimension_numbers<[1], [0], [0], [1], [0, 0, 1, 1], [], []>} : vector<8x64xbf16>, vector<64x32xbf16>, vector<8x32xf32> -> vector<8x32xf32>
    %132 = arith.addf %131, %27 : vector<8x32xf32>
    %cst_75 = arith.constant dense<0.000000e+00> : vector<8x32xf32>
    %133 = tpu.matmul %130, %24, %cst_75 {dimension_numbers = #tpu.dot_dimension_numbers<[1], [0], [0], [1], [0, 0, 1, 1], [], []>} : vector<8x64xbf16>, vector<64x32xbf16>, vector<8x32xf32> -> vector<8x32xf32>
    %134 = arith.addf %133, %30 : vector<8x32xf32>
    %135 = arith.negf %134 : vector<8x32xf32>
    %136 = math.exp %135 : vector<8x32xf32>
    %cst_76 = arith.constant 1.000000e+00 : f32
    %137 = vector.broadcast %cst_76 : f32 to vector<8x32xf32>
    %138 = arith.addf %137, %136 : vector<8x32xf32>
    %139 = arith.divf %137, %138 : vector<8x32xf32>
    %140 = arith.index_cast %c3_i32 : i32 to index
    %c0_77 = arith.constant 0 : index
    %c0_78 = arith.constant 0 : index
    %141 = vector.load %arg13[%140, %c0_77, %c0_78] : memref<4x8x32xf32, #tpu.memory_space<vmem>>, vector<1x8x32xf32>
    %142 = vector.shape_cast %141 : vector<1x8x32xf32> to vector<8x32xf32>
    %143 = vector.shape_cast %139 : vector<8x32xf32> to vector<1x8x32xf32>
    tpu.vector_store %arg13[%140, %c0_77, %c0_78], %143 {strides = array<i32>} : memref<4x8x32xf32, #tpu.memory_space<vmem>>, vector<1x8x32xf32>,
    %cst_79 = arith.constant 0.000000e+00 : f32
    %144 = vector.broadcast %cst_79 : f32 to vector<8x32xf32>
    %145 = arith.maximumf %132, %144 : vector<8x32xf32>
    %146 = arith.index_cast %c3_i32 : i32 to index
    %c0_80 = arith.constant 0 : index
    %c0_81 = arith.constant 0 : index
    %147 = vector.load %arg5[%146, %c0_80, %c0_81] : memref<4x8x32xf32, #tpu.memory_space<vmem>>, vector<1x8x32xf32>
    %148 = vector.shape_cast %147 : vector<1x8x32xf32> to vector<8x32xf32>
    %cst_82 = arith.constant 2.000000e+00 : f32
    %149 = vector.broadcast %cst_82 : f32 to vector<8x32xf32>
    %150 = arith.mulf %149, %148 : vector<8x32xf32>
    %151 = arith.addf %145, %150 : vector<8x32xf32>
    %c4_i32 = arith.constant 4 : i32
    %c0_83 = arith.constant 0 : index
    %c0_84 = arith.constant 0 : index
    %152 = vector.load %arg14[%c0_83, %c0_84] : memref<8x32xf32, #tpu.memory_space<vmem>>, vector<8x32xf32>
    tpu.vector_store %arg14[%c0_83, %c0_84], %151 {strides = array<i32>} : memref<8x32xf32, #tpu.memory_space<vmem>>, vector<8x32xf32>,
    return
  }
  func.func @transform_0(%arg0: i32, %arg1: i32) -> (i32, i32, i32) {
    %c0_i32 = arith.constant 0 : i32
    %c0_i32_0 = arith.constant 0 : i32
    return %arg1, %arg0, %c0_i32 : i32, i32, i32
  }
  func.func @transform_1(%arg0: i32, %arg1: i32) -> (i32, i32, i32) {
    %c0_i32 = arith.constant 0 : i32
    %c0_i32_0 = arith.constant 0 : i32
    return %arg1, %arg0, %c0_i32 : i32, i32, i32
  }
  func.func @transform_2(%arg0: i32, %arg1: i32) -> (i32, i32, i32) {
    %c0_i32 = arith.constant 0 : i32
    %c0_i32_0 = arith.constant 0 : i32
    return %arg1, %arg0, %c0_i32 : i32, i32, i32
  }
  func.func @transform_3(%arg0: i32, %arg1: i32) -> (i32, i32, i32) {
    %c0_i32 = arith.constant 0 : i32
    %c0_i32_0 = arith.constant 0 : i32
    return %arg1, %arg0, %c0_i32 : i32, i32, i32
  }
  func.func @transform_4(%arg0: i32, %arg1: i32) -> (i32, i32) {
    %c0_i32 = arith.constant 0 : i32
    %c0_i32_0 = arith.constant 0 : i32
    %c0_i32_1 = arith.constant 0 : i32
    return %c0_i32, %c0_i32_0 : i32, i32
  }
  func.func @transform_5(%arg0: i32, %arg1: i32) -> (i32, i32) {
    %c0_i32 = arith.constant 0 : i32
    %c0_i32_0 = arith.constant 0 : i32
    %c0_i32_1 = arith.constant 0 : i32
    return %c0_i32, %c0_i32_0 : i32, i32
  }
  func.func @transform_6(%arg0: i32, %arg1: i32) -> (i32, i32) {
    %c0_i32 = arith.constant 0 : i32
    %c0_i32_0 = arith.constant 0 : i32
    %c0_i32_1 = arith.constant 0 : i32
    return %c0_i32, %c0_i32_0 : i32, i32
  }
  func.func @transform_7(%arg0: i32, %arg1: i32) -> (i32, i32) {
    %c0_i32 = arith.constant 0 : i32
    %c0_i32_0 = arith.constant 0 : i32
    %c0_i32_1 = arith.constant 0 : i32
    return %c0_i32, %c0_i32_0 : i32, i32
  }
  func.func @transform_8(%arg0: i32, %arg1: i32) -> (i32, i32) {
    %c0_i32 = arith.constant 0 : i32
    %c0_i32_0 = arith.constant 0 : i32
    %c0_i32_1 = arith.constant 0 : i32
    return %c0_i32, %c0_i32_0 : i32, i32
  }
  func.func @transform_9(%arg0: i32, %arg1: i32) -> (i32, i32) {
    %c0_i32 = arith.constant 0 : i32
    %c0_i32_0 = arith.constant 0 : i32
    %c0_i32_1 = arith.constant 0 : i32
    return %c0_i32, %c0_i32_0 : i32, i32
  }
  func.func @transform_10(%arg0: i32, %arg1: i32) -> (i32, i32) {
    %c0_i32 = arith.constant 0 : i32
    %c0_i32_0 = arith.constant 0 : i32
    %c0_i32_1 = arith.constant 0 : i32
    return %c0_i32, %c0_i32_0 : i32, i32
  }
  func.func @transform_11(%arg0: i32, %arg1: i32) -> (i32, i32, i32) {
    %c0_i32 = arith.constant 0 : i32
    %c0_i32_0 = arith.constant 0 : i32
    return %arg1, %arg0, %c0_i32 : i32, i32, i32
  }
}

</mosaic_0001>

<llo_original>
// kernel: untied_gsn_forward.1
$region0: #{untied_gsn_forward.1}
  #allocation0 [shape = 'u32[]', space=smem, size = 0x4, offset = 0x4, fixed_abs, tag = 'smem constant byte address 0x4 - core index']
  #allocation1 [shape = 'u32[144,128]{1,0:T(1,128)}', space=vmem, size = 0x12000, scoped, tag = 'internal scratch']
  #allocation2 [shape = 'f32[8,32]{1,0:T(8,128)}', space=vmem, size = 0x1000, scoped, tag = 'scratch operand']
  #allocation3 [shape = 'f32[4,8,64]{2,1,0:T(8,128)}', space=vmem, size = 0x4000, scoped, tag = 'scratch operand']
  %s0 = inlined_call_operand.hbm [shape: f32[8,8,32], index: 0, kind: input, shape index: {}]
  %s1 = inlined_call_operand.hbm [shape: f32[8,8,32], index: 1, kind: input, shape index: {}]
  %s2 = inlined_call_operand.hbm [shape: f32[8,8,32], index: 2, kind: input, shape index: {}]
  %s3 = inlined_call_operand.hbm [shape: f32[8,8,32], index: 3, kind: input, shape index: {}]
  %s4 = inlined_call_operand.hbm [shape: bf16[32,64], index: 4, kind: input, shape index: {}]
  %s5 = inlined_call_operand.hbm [shape: bf16[32,64], index: 5, kind: input, shape index: {}]
  %s6 = inlined_call_operand.hbm [shape: bf16[64,32], index: 6, kind: input, shape index: {}]
  %s7 = inlined_call_operand.hbm [shape: bf16[64,32], index: 7, kind: input, shape index: {}]
  %s8 = inlined_call_operand.hbm [shape: f32[1,64], index: 8, kind: input, shape index: {}]
  %s9 = inlined_call_operand.hbm [shape: f32[1,32], index: 9, kind: input, shape index: {}]
  %s10 = inlined_call_operand.hbm [shape: f32[1,32], index: 10, kind: input, shape index: {}]
  %s11 = inlined_call_operand.hbm [shape: f32[8,8,32], index: 11, kind: output, shape index: {}]
  %s12 = sld [smem:[#allocation0]]
  $region125: #{untied_gsn_forward.1} parent=0
    _
  %s14 = ssub.s32 1, %s12
  %s15 = scalar_select 0, %s14, %s12
  $region1: #{untied_gsn_forward.1} parent=0
    #allocation4 [shape = 'u8[32768]{0}', space=vmem, size = 0x8000, scoped, tag = 'input window, operand 0']
    #allocation5 [shape = 's32[2]{0}', space=sflag, size = 0x8, scoped, tag = 'scoped memory for untied_gsn_forward.1']
    #allocation6 [shape = 's32[2]{0}', space=sflag, size = 0x8, scoped, tag = 'scoped memory for untied_gsn_forward.1']
    #allocation7 [shape = 'u8[32768]{0}', space=vmem, size = 0x8000, scoped, tag = 'input window, operand 1']
    #allocation8 [shape = 's32[2]{0}', space=sflag, size = 0x8, scoped, tag = 'scoped memory for untied_gsn_forward.1']
    #allocation9 [shape = 'u8[32768]{0}', space=vmem, size = 0x8000, scoped, tag = 'input window, operand 2']
    #allocation10 [shape = 'u8[32768]{0}', space=vmem, size = 0x8000, scoped, tag = 'input window, operand 3']
    #allocation11 [shape = 's32[2]{0}', space=sflag, size = 0x8, scoped, tag = 'scoped memory for untied_gsn_forward.1']
    #allocation12 [shape = 'u8[8192]{0}', space=vmem, size = 0x2000, scoped, tag = 'input window, operand 4, single buffered']
    #allocation13 [shape = 'u8[8192]{0}', space=vmem, size = 0x2000, scoped, tag = 'input window, operand 5, single buffered']
    #allocation14 [shape = 's32[1]{0}', space=sflag, size = 0x4, scoped, tag = 'scoped memory for untied_gsn_forward.1']
    #allocation15 [shape = 'u8[16384]{0}', space=vmem, size = 0x4000, scoped, tag = 'input window, operand 6, single buffered']
    #allocation16 [shape = 'u8[16384]{0}', space=vmem, size = 0x4000, scoped, tag = 'input window, operand 7, single buffered']
    #allocation17 [shape = 's32[1]{0}', space=sflag, size = 0x4, scoped, tag = 'scoped memory for untied_gsn_forward.1']
    #allocation18 [shape = 'u8[512]{0}', space=vmem, size = 0x400, scoped, tag = 'input window, operand 8, single buffered']
    #allocation19 [shape = 'u8[512]{0}', space=vmem, size = 0x400, scoped, tag = 'input window, operand 9, single buffered']
    #allocation20 [shape = 's32[1]{0}', space=sflag, size = 0x4, scoped, tag = 'scoped memory for untied_gsn_forward.1']
    #allocation21 [shape = 'u8[512]{0}', space=vmem, size = 0x400, scoped, tag = 'input window, operand 10, single buffered']
    #allocation22 [shape = 'u8[32768]{0}', space=vmem, size = 0x8000, scoped, tag = 'output window, operand 0']
    %16 = vsyncpa [#allocation5], 0
    %s17 = scalar_lea.sflag [#allocation5], 1
    %18 = vsyncpa %s17, 0
    %19 = vsyncpa [#allocation8], 0
    %s20 = scalar_lea.sflag [#allocation8], 1
    %21 = vsyncpa %s20, 0
    %22 = vsyncpa [#allocation11], 0
    %s23 = scalar_lea.sflag [#allocation11], 1
    %24 = vsyncpa %s23, 0
    %25 = vsyncpa [#allocation14], 0
    %26 = vsyncpa [#allocation17], 0
    %27 = vsyncpa [#allocation20], 0
    %28 = vsyncpa [#allocation6], 0
    %s29 = scalar_lea.sflag [#allocation6], 1
    %30 = vsyncpa %s29, 0
    loop: start=0, step=1, limit=4
    $region2: #{untied_gsn_forward.1} parent=1 // loop_pre_header
      _
    $region3: #{untied_gsn_forward.1} parent=1 // loop_header
      %s32 = sphi 0, %s36
      %p33 = scmp.ge.s32.totalorder %s32, 4
      %s39 = sphi 0, %s51
      %s40 = sphi 0, %s47
      %s41 = sphi 0, %s39
      %s42 = sphi 0, %s40
      %s43 = sphi 0, %s41
      %s44 = sphi 0, %s42
      %s56 = sphi 0, %s58
      %s59 = sphi 0, %s56
      %s60 = sphi 0, %s59
      %s76 = sphi 0, %s60
      %s84 = sphi 0, %s86
      %s87 = sphi 0, %s84
      %s88 = sphi 0, %s87
      %s104 = sphi 0, %s88
      %s112 = sphi 0, %s114
      %s115 = sphi 0, %s112
      %s116 = sphi 0, %s115
      %s132 = sphi 0, %s116
      %s140 = sphi 0, %s142
      %s143 = sphi 0, %s140
      %s144 = sphi 0, %s143
      %s160 = sphi 0, %s144
      %s164 = sphi 0, %s164
      %s166 = sphi 0, %s164
      %s167 = sphi 0, %s166
      %s181 = sphi 0, %s167
      %s185 = sphi 0, %s185
      %s187 = sphi 0, %s185
      %s188 = sphi 0, %s187
      %s202 = sphi 0, %s188
      %s206 = sphi 0, %s206
      %s208 = sphi 0, %s206
      %s209 = sphi 0, %s208
      %s223 = sphi 0, %s209
      %s227 = sphi 0, %s227
      %s229 = sphi 0, %s227
      %s230 = sphi 0, %s229
      %s244 = sphi 0, %s230
      %s248 = sphi 0, %s248
      %s250 = sphi 0, %s248
      %s251 = sphi 0, %s250
      %s265 = sphi 0, %s251
      %s269 = sphi 0, %s269
      %s271 = sphi 0, %s269
      %s272 = sphi 0, %s271
      %s286 = sphi 0, %s272
      %s290 = sphi 0, %s290
      %s292 = sphi 0, %s290
      %s293 = sphi 0, %s292
      %s307 = sphi 0, %s293
      %s315 = sphi 0, %s317
      %s318 = sphi 0, %s315
      %s319 = sphi 0, %s318
      %s335 = sphi 0, %s319
    $region4: #{untied_gsn_forward.1} parent=1 // loop_header_branch
      %35 = sbr.rel (%p33) target = $region8
    $region5: #{untied_gsn_forward.1} parent=1 // loop_body
      %s37 = ssub.s32 %s32, 1
      %s38 = ssub.s32 %s32, 2
      %s45 = sadd.s32 1, %s40
      %p46 = scmp.ge.s32.totalorder %s45, 2
      %s47 = scalar_select %p46, 0, %s45
      %s48 = sadd.s32 1, %s39
      %s49 = scalar_select %p46, %s48, %s39
      %p50 = scmp.ge.s32.totalorder %s49, 1
      %s51 = scalar_select %p50, 0, %s49
      %s52 = ssub.s32 %s40, %s47
      %s53 = ssub.s32 %s39, %s51
      %s54 = sor.u32 %s52, %s53
      %p55 = scmp.eq.s32.totalorder %s54, 0
      %s57 = sadd.s32 %s56, 1
      %s58 = scalar_select %p55, %s56, %s57
      %p61 = pneg %p55
      %p62 = scmp.eq.s32.totalorder %s32, 1
      %p63 = por %p61, %p62
      %p64 = scmp.ne.s32.totalorder %s56, %s59
      %p65 = scmp.eq.s32.totalorder %s32, 0
      %p66 = por %p64, %p65
      %p67 = scmp.ne.s32.totalorder %s56, %s59
      %p68 = scmp.eq.s32.totalorder %s37, 1
      %p69 = por %p67, %p68
      %p70 = scmp.ne.s32.totalorder %s59, %s60
      %p71 = scmp.eq.s32.totalorder %s37, 0
      %p72 = por %p70, %p71
      %p73 = scmp.ne.s32.totalorder %s59, %s60
      %p74 = scmp.eq.s32.totalorder %s38, 1
      %p75 = por %p73, %p74
      %p77 = scmp.ne.s32.totalorder %s60, %s76
      %p78 = scmp.eq.s32.totalorder %s38, 0
      %p79 = por %p77, %p78
      %s80 = ssub.s32 %s40, %s47
      %s81 = ssub.s32 %s39, %s51
      %s82 = sor.u32 %s80, %s81
      %p83 = scmp.eq.s32.totalorder %s82, 0
      %s85 = sadd.s32 %s84, 1
      %s86 = scalar_select %p83, %s84, %s85
      %p89 = pneg %p83
      %p90 = scmp.eq.s32.totalorder %s32, 1
      %p91 = por %p89, %p90
      %p92 = scmp.ne.s32.totalorder %s84, %s87
      %p93 = scmp.eq.s32.totalorder %s32, 0
      %p94 = por %p92, %p93
      %p95 = scmp.ne.s32.totalorder %s84, %s87
      %p96 = scmp.eq.s32.totalorder %s37, 1
      %p97 = por %p95, %p96
      %p98 = scmp.ne.s32.totalorder %s87, %s88
      %p99 = scmp.eq.s32.totalorder %s37, 0
      %p100 = por %p98, %p99
      %p101 = scmp.ne.s32.totalorder %s87, %s88
      %p102 = scmp.eq.s32.totalorder %s38, 1
      %p103 = por %p101, %p102
      %p105 = scmp.ne.s32.totalorder %s88, %s104
      %p106 = scmp.eq.s32.totalorder %s38, 0
      %p107 = por %p105, %p106
      %s108 = ssub.s32 %s40, %s47
      %s109 = ssub.s32 %s39, %s51
      %s110 = sor.u32 %s108, %s109
      %p111 = scmp.eq.s32.totalorder %s110, 0
      %s113 = sadd.s32 %s112, 1
      %s114 = scalar_select %p111, %s112, %s113
      %p117 = pneg %p111
      %p118 = scmp.eq.s32.totalorder %s32, 1
      %p119 = por %p117, %p118
      %p120 = scmp.ne.s32.totalorder %s112, %s115
      %p121 = scmp.eq.s32.totalorder %s32, 0
      %p122 = por %p120, %p121
      %p123 = scmp.ne.s32.totalorder %s112, %s115
      %p124 = scmp.eq.s32.totalorder %s37, 1
      %p125 = por %p123, %p124
      %p126 = scmp.ne.s32.totalorder %s115, %s116
      %p127 = scmp.eq.s32.totalorder %s37, 0
      %p128 = por %p126, %p127
      %p129 = scmp.ne.s32.totalorder %s115, %s116
      %p130 = scmp.eq.s32.totalorder %s38, 1
      %p131 = por %p129, %p130
      %p133 = scmp.ne.s32.totalorder %s116, %s132
      %p134 = scmp.eq.s32.totalorder %s38, 0
      %p135 = por %p133, %p134
      %s136 = ssub.s32 %s40, %s47
      %s137 = ssub.s32 %s39, %s51
      %s138 = sor.u32 %s136, %s137
      %p139 = scmp.eq.s32.totalorder %s138, 0
      %s141 = sadd.s32 %s140, 1
      %s142 = scalar_select %p139, %s140, %s141
      %p145 = pneg %p139
      %p146 = scmp.eq.s32.totalorder %s32, 1
      %p147 = por %p145, %p146
      %p148 = scmp.ne.s32.totalorder %s140, %s143
      %p149 = scmp.eq.s32.totalorder %s32, 0
      %p150 = por %p148, %p149
      %p151 = scmp.ne.s32.totalorder %s140, %s143
      %p152 = scmp.eq.s32.totalorder %s37, 1
      %p153 = por %p151, %p152
      %p154 = scmp.ne.s32.totalorder %s143, %s144
      %p155 = scmp.eq.s32.totalorder %s37, 0
      %p156 = por %p154, %p155
      %p157 = scmp.ne.s32.totalorder %s143, %s144
      %p158 = scmp.eq.s32.totalorder %s38, 1
      %p159 = por %p157, %p158
      %p161 = scmp.ne.s32.totalorder %s144, %s160
      %p162 = scmp.eq.s32.totalorder %s38, 0
      %p163 = por %p161, %p162
      %s165 = sadd.s32 %s164, 1
      %p168 = scmp.eq.s32.totalorder %s32, 1
      %p169 = scmp.ne.s32.totalorder %s164, %s166
      %p170 = scmp.eq.s32.totalorder %s32, 0
      %p171 = por %p169, %p170
      %p172 = scmp.ne.s32.totalorder %s164, %s166
      %p173 = scmp.eq.s32.totalorder %s37, 1
      %p174 = por %p172, %p173
      %p175 = scmp.ne.s32.totalorder %s166, %s167
      %p176 = scmp.eq.s32.totalorder %s37, 0
      %p177 = por %p175, %p176
      %p178 = scmp.ne.s32.totalorder %s166, %s167
      %p179 = scmp.eq.s32.totalorder %s38, 1
      %p180 = por %p178, %p179
      %p182 = scmp.ne.s32.totalorder %s167, %s181
      %p183 = scmp.eq.s32.totalorder %s38, 0
      %p184 = por %p182, %p183
      %s186 = sadd.s32 %s185, 1
      %p189 = scmp.eq.s32.totalorder %s32, 1
      %p190 = scmp.ne.s32.totalorder %s185, %s187
      %p191 = scmp.eq.s32.totalorder %s32, 0
      %p192 = por %p190, %p191
      %p193 = scmp.ne.s32.totalorder %s185, %s187
      %p194 = scmp.eq.s32.totalorder %s37, 1
      %p195 = por %p193, %p194
      %p196 = scmp.ne.s32.totalorder %s187, %s188
      %p197 = scmp.eq.s32.totalorder %s37, 0
      %p198 = por %p196, %p197
      %p199 = scmp.ne.s32.totalorder %s187, %s188
      %p200 = scmp.eq.s32.totalorder %s38, 1
      %p201 = por %p199, %p200
      %p203 = scmp.ne.s32.totalorder %s188, %s202
      %p204 = scmp.eq.s32.totalorder %s38, 0
      %p205 = por %p203, %p204
      %s207 = sadd.s32 %s206, 1
      %p210 = scmp.eq.s32.totalorder %s32, 1
      %p211 = scmp.ne.s32.totalorder %s206, %s208
      %p212 = scmp.eq.s32.totalorder %s32, 0
      %p213 = por %p211, %p212
      %p214 = scmp.ne.s32.totalorder %s206, %s208
      %p215 = scmp.eq.s32.totalorder %s37, 1
      %p216 = por %p214, %p215
      %p217 = scmp.ne.s32.totalorder %s208, %s209
      %p218 = scmp.eq.s32.totalorder %s37, 0
      %p219 = por %p217, %p218
      %p220 = scmp.ne.s32.totalorder %s208, %s209
      %p221 = scmp.eq.s32.totalorder %s38, 1
      %p222 = por %p220, %p221
      %p224 = scmp.ne.s32.totalorder %s209, %s223
      %p225 = scmp.eq.s32.totalorder %s38, 0
      %p226 = por %p224, %p225
      %s228 = sadd.s32 %s227, 1
      %p231 = scmp.eq.s32.totalorder %s32, 1
      %p232 = scmp.ne.s32.totalorder %s227, %s229
      %p233 = scmp.eq.s32.totalorder %s32, 0
      %p234 = por %p232, %p233
      %p235 = scmp.ne.s32.totalorder %s227, %s229
      %p236 = scmp.eq.s32.totalorder %s37, 1
      %p237 = por %p235, %p236
      %p238 = scmp.ne.s32.totalorder %s229, %s230
      %p239 = scmp.eq.s32.totalorder %s37, 0
      %p240 = por %p238, %p239
      %p241 = scmp.ne.s32.totalorder %s229, %s230
      %p242 = scmp.eq.s32.totalorder %s38, 1
      %p243 = por %p241, %p242
      %p245 = scmp.ne.s32.totalorder %s230, %s244
      %p246 = scmp.eq.s32.totalorder %s38, 0
      %p247 = por %p245, %p246
      %s249 = sadd.s32 %s248, 1
      %p252 = scmp.eq.s32.totalorder %s32, 1
      %p253 = scmp.ne.s32.totalorder %s248, %s250
      %p254 = scmp.eq.s32.totalorder %s32, 0
      %p255 = por %p253, %p254
      %p256 = scmp.ne.s32.totalorder %s248, %s250
      %p257 = scmp.eq.s32.totalorder %s37, 1
      %p258 = por %p256, %p257
      %p259 = scmp.ne.s32.totalorder %s250, %s251
      %p260 = scmp.eq.s32.totalorder %s37, 0
      %p261 = por %p259, %p260
      %p262 = scmp.ne.s32.totalorder %s250, %s251
      %p263 = scmp.eq.s32.totalorder %s38, 1
      %p264 = por %p262, %p263
      %p266 = scmp.ne.s32.totalorder %s251, %s265
      %p267 = scmp.eq.s32.totalorder %s38, 0
      %p268 = por %p266, %p267
      %s270 = sadd.s32 %s269, 1
      %p273 = scmp.eq.s32.totalorder %s32, 1
      %p274 = scmp.ne.s32.totalorder %s269, %s271
      %p275 = scmp.eq.s32.totalorder %s32, 0
      %p276 = por %p274, %p275
      %p277 = scmp.ne.s32.totalorder %s269, %s271
      %p278 = scmp.eq.s32.totalorder %s37, 1
      %p279 = por %p277, %p278
      %p280 = scmp.ne.s32.totalorder %s271, %s272
      %p281 = scmp.eq.s32.totalorder %s37, 0
      %p282 = por %p280, %p281
      %p283 = scmp.ne.s32.totalorder %s271, %s272
      %p284 = scmp.eq.s32.totalorder %s38, 1
      %p285 = por %p283, %p284
      %p287 = scmp.ne.s32.totalorder %s272, %s286
      %p288 = scmp.eq.s32.totalorder %s38, 0
      %p289 = por %p287, %p288
      %s291 = sadd.s32 %s290, 1
      %p294 = scmp.eq.s32.totalorder %s32, 1
      %p295 = scmp.ne.s32.totalorder %s290, %s292
      %p296 = scmp.eq.s32.totalorder %s32, 0
      %p297 = por %p295, %p296
      %p298 = scmp.ne.s32.totalorder %s290, %s292
      %p299 = scmp.eq.s32.totalorder %s37, 1
      %p300 = por %p298, %p299
      %p301 = scmp.ne.s32.totalorder %s292, %s293
      %p302 = scmp.eq.s32.totalorder %s37, 0
      %p303 = por %p301, %p302
      %p304 = scmp.ne.s32.totalorder %s292, %s293
      %p305 = scmp.eq.s32.totalorder %s38, 1
      %p306 = por %p304, %p305
      %p308 = scmp.ne.s32.totalorder %s293, %s307
      %p309 = scmp.eq.s32.totalorder %s38, 0
      %p310 = por %p308, %p309
      %s311 = ssub.s32 %s40, %s47
      %s312 = ssub.s32 %s39, %s51
      %s313 = sor.u32 %s311, %s312
      %p314 = scmp.eq.s32.totalorder %s313, 0
      %s316 = sadd.s32 %s315, 1
      %s317 = scalar_select %p314, %s315, %s316
      %p320 = pneg %p314
      %p321 = scmp.eq.s32.totalorder %s32, 1
      %p322 = por %p320, %p321
      %p323 = scmp.ne.s32.totalorder %s315, %s318
      %p324 = scmp.eq.s32.totalorder %s32, 0
      %p325 = por %p323, %p324
      %p326 = scmp.ne.s32.totalorder %s315, %s318
      %p327 = scmp.eq.s32.totalorder %s37, 1
      %p328 = por %p326, %p327
      %p329 = scmp.ne.s32.totalorder %s318, %s319
      %p330 = scmp.eq.s32.totalorder %s37, 0
      %p331 = por %p329, %p330
      %p332 = scmp.ne.s32.totalorder %s318, %s319
      %p333 = scmp.eq.s32.totalorder %s38, 1
      %p334 = por %p332, %p333
      %p336 = scmp.ne.s32.totalorder %s319, %s335
      %p337 = scmp.eq.s32.totalorder %s38, 0
      %p338 = por %p336, %p337
      %p339 = scmp.le.s32.totalorder 1, %s32
      %p340 = scmp.lt.s32.totalorder %s32, 3
      %p341 = pnand %p339, %p340
      %p342 = pneg %p341
      // Predicated region
      $region9: #{untied_gsn_forward.1} parent=5 // pred_check
        _
      $region10: #{untied_gsn_forward.1} parent=5 // pred_check_branch
        %344 = sbr.rel (%p341) target = $region12
      $region11: #{untied_gsn_forward.1} parent=5 // pred_region
        %s345 = ssub.s32 %s32, 1
        // Predicated region
        $region13: #{untied_gsn_forward.1} parent=11 // pred_check
          %p346 = pneg %p177
        $region14: #{untied_gsn_forward.1} parent=11 // pred_check_branch
          %348 = sbr.rel (%p346) target = $region16
        $region15: #{untied_gsn_forward.1} parent=11 // pred_region
          %s350 = ssub.s32 256, 256
          %351 = vsyncadd [#allocation11], %s350
          %s352 = sshll.u32 [#allocation12], 4
          %s353 = int_to_ptr.vmem [resolvable:$true] %s352
          %358 = dma.hbm_to_vmem [thread:$0]  %s4, 256, %s353, [#allocation11], 64, 64, 4
        $region16: #{untied_gsn_forward.1} parent=11 // pred_fallthru
          _
        // Predicated region
        $region17: #{untied_gsn_forward.1} parent=11 // pred_check
          %p359 = pneg %p198
        $region18: #{untied_gsn_forward.1} parent=11 // pred_check_branch
          %361 = sbr.rel (%p359) target = $region20
        $region19: #{untied_gsn_forward.1} parent=11 // pred_region
          %s363 = ssub.s32 256, 256
          %364 = vsyncadd [#allocation14], %s363
          %s365 = sshll.u32 [#allocation13], 4
          %s366 = int_to_ptr.vmem [resolvable:$true] %s365
          %371 = dma.hbm_to_vmem [thread:$0]  %s5, 256, %s366, [#allocation14], 64, 64, 4
        $region20: #{untied_gsn_forward.1} parent=11 // pred_fallthru
          _
        // Predicated region
        $region21: #{untied_gsn_forward.1} parent=11 // pred_check
          %p372 = pneg %p219
        $region22: #{untied_gsn_forward.1} parent=11 // pred_check_branch
          %374 = sbr.rel (%p372) target = $region24
        $region23: #{untied_gsn_forward.1} parent=11 // pred_region
          %s376 = ssub.s32 512, 512
          %377 = vsyncadd [#allocation14], %s376
          %s378 = sshll.u32 [#allocation15], 4
          %s379 = int_to_ptr.vmem [resolvable:$true] %s378
          %384 = dma.hbm_to_vmem [thread:$0]  %s6, 512, %s379, [#allocation14], 64, 64, 4
        $region24: #{untied_gsn_forward.1} parent=11 // pred_fallthru
          _
        // Predicated region
        $region25: #{untied_gsn_forward.1} parent=11 // pred_check
          %p385 = pneg %p240
        $region26: #{untied_gsn_forward.1} parent=11 // pred_check_branch
          %387 = sbr.rel (%p385) target = $region28
        $region27: #{untied_gsn_forward.1} parent=11 // pred_region
          %s389 = ssub.s32 512, 512
          %390 = vsyncadd [#allocation17], %s389
          %s391 = sshll.u32 [#allocation16], 4
          %s392 = int_to_ptr.vmem [resolvable:$true] %s391
          %397 = dma.hbm_to_vmem [thread:$0]  %s7, 512, %s392, [#allocation17], 64, 64, 4
        $region28: #{untied_gsn_forward.1} parent=11 // pred_fallthru
          _
        // Predicated region
        $region29: #{untied_gsn_forward.1} parent=11 // pred_check
          %p398 = pneg %p261
        $region30: #{untied_gsn_forward.1} parent=11 // pred_check_branch
          %400 = sbr.rel (%p398) target = $region32
        $region31: #{untied_gsn_forward.1} parent=11 // pred_region
          %s402 = ssub.s32 16, 16
          %403 = vsyncadd [#allocation17], %s402
          %s405 = sshll.u32 [#allocation18], 4
          %s406 = int_to_ptr.vmem [resolvable:$true] %s405
          %408 = dma.hbm_to_vmem [thread:$0]  %s8, 16, %s406, [#allocation17]
        $region32: #{untied_gsn_forward.1} parent=11 // pred_fallthru
          _
        // Predicated region
        $region33: #{untied_gsn_forward.1} parent=11 // pred_check
          %p409 = pneg %p282
        $region34: #{untied_gsn_forward.1} parent=11 // pred_check_branch
          %411 = sbr.rel (%p409) target = $region36
        $region35: #{untied_gsn_forward.1} parent=11 // pred_region
          %s413 = ssub.s32 16, 16
          %414 = vsyncadd [#allocation20], %s413
          %s416 = sshll.u32 [#allocation19], 4
          %s417 = int_to_ptr.vmem [resolvable:$true] %s416
          %419 = dma.hbm_to_vmem [thread:$0]  %s9, 16, %s417, [#allocation20]
        $region36: #{untied_gsn_forward.1} parent=11 // pred_fallthru
          _
        // Predicated region
        $region37: #{untied_gsn_forward.1} parent=11 // pred_check
          %p420 = pneg %p303
        $region38: #{untied_gsn_forward.1} parent=11 // pred_check_branch
          %422 = sbr.rel (%p420) target = $region40
        $region39: #{untied_gsn_forward.1} parent=11 // pred_region
          %s424 = ssub.s32 16, 16
          %425 = vsyncadd [#allocation20], %s424
          %s427 = sshll.u32 [#allocation21], 4
          %s428 = int_to_ptr.vmem [resolvable:$true] %s427
          %430 = dma.hbm_to_vmem [thread:$0]  %s10, 16, %s428, [#allocation20]
        $region40: #{untied_gsn_forward.1} parent=11 // pred_fallthru
          _
      $region12: #{untied_gsn_forward.1} parent=5 // pred_fallthru
        _
      %p431 = scmp.lt.s32.totalorder %s32, 2
      // Predicated region
      $region41: #{untied_gsn_forward.1} parent=5 // pred_check
        %p432 = pneg %p431
      $region42: #{untied_gsn_forward.1} parent=5 // pred_check_branch
        %434 = sbr.rel (%p432) target = $region44
      $region43: #{untied_gsn_forward.1} parent=5 // pred_region
        // Predicated region
        $region45: #{untied_gsn_forward.1} parent=43 // pred_check
          %p435 = pneg %p66
        $region46: #{untied_gsn_forward.1} parent=43 // pred_check_branch
          %437 = sbr.rel (%p435) target = $region48
        $region47: #{untied_gsn_forward.1} parent=43 // pred_region
          %s438 = sand.u32 %s56, 1
          %s439 = scalar_lea.sflag [#allocation5], %s438
          %s440 = sand.u32 %s56, 1
          %s441 = smul.addr %s440, 32
          %s442 = scalar_lea.vmem [#allocation4], %s441
          %s443 = smul.u32 4, %s40
          %s445 = ssub.s32 512, 512
          %446 = vsyncadd %s439, %s445
          %s447 = sadd.s32 %s39, %s443
          %s448 = smul.addr %s447, 128
          %s449 = scalar_lea.hbm %s0, %s448
          %s450 = sshll.u32 %s442, 4
          %s451 = int_to_ptr.vmem [resolvable:$true] %s450
          %456 = dma.hbm_to_vmem [thread:$0]  %s449, 512, %s451, %s439, 128, 128, 8
        $region48: #{untied_gsn_forward.1} parent=43 // pred_fallthru
          _
        // Predicated region
        $region49: #{untied_gsn_forward.1} parent=43 // pred_check
          %p457 = pneg %p94
        $region50: #{untied_gsn_forward.1} parent=43 // pred_check_branch
          %459 = sbr.rel (%p457) target = $region52
        $region51: #{untied_gsn_forward.1} parent=43 // pred_region
          %s460 = sand.u32 %s32, 1
          %s461 = scalar_lea.sflag [#allocation8], %s460
          %s462 = sand.u32 %s84, 1
          %s463 = smul.addr %s462, 32
          %s464 = scalar_lea.vmem [#allocation7], %s463
          %s465 = smul.u32 4, %s40
          %s467 = ssub.s32 512, 512
          %468 = vsyncadd %s461, %s467
          %s469 = sadd.s32 %s39, %s465
          %s470 = smul.addr %s469, 128
          %s471 = scalar_lea.hbm %s1, %s470
          %s472 = sshll.u32 %s464, 4
          %s473 = int_to_ptr.vmem [resolvable:$true] %s472
          %478 = dma.hbm_to_vmem [thread:$0]  %s471, 512, %s473, %s461, 128, 128, 8
        $region52: #{untied_gsn_forward.1} parent=43 // pred_fallthru
          _
        // Predicated region
        $region53: #{untied_gsn_forward.1} parent=43 // pred_check
          %p479 = pneg %p122
        $region54: #{untied_gsn_forward.1} parent=43 // pred_check_branch
          %481 = sbr.rel (%p479) target = $region56
        $region55: #{untied_gsn_forward.1} parent=43 // pred_region
          %s482 = sand.u32 %s32, 1
          %s483 = scalar_lea.sflag [#allocation8], %s482
          %s484 = sand.u32 %s112, 1
          %s485 = smul.addr %s484, 32
          %s486 = scalar_lea.vmem [#allocation9], %s485
          %s487 = smul.u32 4, %s40
          %s489 = ssub.s32 512, 512
          %490 = vsyncadd %s483, %s489
          %s491 = sadd.s32 %s39, %s487
          %s492 = smul.addr %s491, 128
          %s493 = scalar_lea.hbm %s2, %s492
          %s494 = sshll.u32 %s486, 4
          %s495 = int_to_ptr.vmem [resolvable:$true] %s494
          %500 = dma.hbm_to_vmem [thread:$0]  %s493, 512, %s495, %s483, 128, 128, 8
        $region56: #{untied_gsn_forward.1} parent=43 // pred_fallthru
          _
        // Predicated region
        $region57: #{untied_gsn_forward.1} parent=43 // pred_check
          %p501 = pneg %p150
        $region58: #{untied_gsn_forward.1} parent=43 // pred_check_branch
          %503 = sbr.rel (%p501) target = $region60
        $region59: #{untied_gsn_forward.1} parent=43 // pred_region
          %s504 = sand.u32 %s32, 1
          %s505 = scalar_lea.sflag [#allocation11], %s504
          %s506 = sand.u32 %s140, 1
          %s507 = smul.addr %s506, 32
          %s508 = scalar_lea.vmem [#allocation10], %s507
          %s509 = smul.u32 4, %s40
          %s511 = ssub.s32 512, 512
          %512 = vsyncadd %s505, %s511
          %s513 = sadd.s32 %s39, %s509
          %s514 = smul.addr %s513, 128
          %s515 = scalar_lea.hbm %s3, %s514
          %s516 = sshll.u32 %s508, 4
          %s517 = int_to_ptr.vmem [resolvable:$true] %s516
          %522 = dma.hbm_to_vmem [thread:$0]  %s515, 512, %s517, %s505, 128, 128, 8
        $region60: #{untied_gsn_forward.1} parent=43 // pred_fallthru
          _
      $region44: #{untied_gsn_forward.1} parent=5 // pred_fallthru
        _
      %p523 = scmp.le.s32.totalorder 1, %s32
      %p524 = scmp.lt.s32.totalorder %s32, 3
      %p525 = pnand %p523, %p524
      %p526 = pneg %p525
      // Predicated region
      $region61: #{untied_gsn_forward.1} parent=5 // pred_check
        _
      $region62: #{untied_gsn_forward.1} parent=5 // pred_check_branch
        %528 = sbr.rel (%p525) target = $region64
      $region63: #{untied_gsn_forward.1} parent=5 // pred_region
        %s529 = ssub.s32 %s32, 1
        %s530 = sand.u32 %s59, 1
        %s531 = scalar_lea.sflag [#allocation5], %s530
        %s532 = sand.u32 %s59, 1
        %s533 = smul.addr %s532, 32
        %s534 = scalar_lea.vmem [#allocation4], %s533
        // Predicated region
        $region65: #{untied_gsn_forward.1} parent=63 // pred_check
          %p535 = pneg %p72
        $region66: #{untied_gsn_forward.1} parent=63 // pred_check_branch
          %537 = sbr.rel (%p535) target = $region68
        $region67: #{untied_gsn_forward.1} parent=63 // pred_region
          %538 = dma.done %s531, 512
        $region68: #{untied_gsn_forward.1} parent=63 // pred_fallthru
          _
        %s539 = sand.u32 %s37, 1
        %s540 = scalar_lea.sflag [#allocation8], %s539
        %s541 = sand.u32 %s87, 1
        %s542 = smul.addr %s541, 32
        %s543 = scalar_lea.vmem [#allocation7], %s542
        // Predicated region
        $region69: #{untied_gsn_forward.1} parent=63 // pred_check
          %p544 = pneg %p100
        $region70: #{untied_gsn_forward.1} parent=63 // pred_check_branch
          %546 = sbr.rel (%p544) target = $region72
        $region71: #{untied_gsn_forward.1} parent=63 // pred_region
          %547 = dma.done %s540, 512
        $region72: #{untied_gsn_forward.1} parent=63 // pred_fallthru
          _
        %s548 = sand.u32 %s37, 1
        %s549 = scalar_lea.sflag [#allocation8], %s548
        %s550 = sand.u32 %s115, 1
        %s551 = smul.addr %s550, 32
        %s552 = scalar_lea.vmem [#allocation9], %s551
        // Predicated region
        $region73: #{untied_gsn_forward.1} parent=63 // pred_check
          %p553 = pneg %p128
        $region74: #{untied_gsn_forward.1} parent=63 // pred_check_branch
          %555 = sbr.rel (%p553) target = $region76
        $region75: #{untied_gsn_forward.1} parent=63 // pred_region
          %556 = dma.done %s549, 512
        $region76: #{untied_gsn_forward.1} parent=63 // pred_fallthru
          _
        %s557 = sand.u32 %s37, 1
        %s558 = scalar_lea.sflag [#allocation11], %s557
        %s559 = sand.u32 %s143, 1
        %s560 = smul.addr %s559, 32
        %s561 = scalar_lea.vmem [#allocation10], %s560
        // Predicated region
        $region77: #{untied_gsn_forward.1} parent=63 // pred_check
          %p562 = pneg %p156
        $region78: #{untied_gsn_forward.1} parent=63 // pred_check_branch
          %564 = sbr.rel (%p562) target = $region80
        $region79: #{untied_gsn_forward.1} parent=63 // pred_region
          %565 = dma.done %s558, 512
        $region80: #{untied_gsn_forward.1} parent=63 // pred_fallthru
          _
        // Predicated region
        $region81: #{untied_gsn_forward.1} parent=63 // pred_check
          %p566 = pneg %p177
        $region82: #{untied_gsn_forward.1} parent=63 // pred_check_branch
          %568 = sbr.rel (%p566) target = $region84
        $region83: #{untied_gsn_forward.1} parent=63 // pred_region
          %569 = dma.done [#allocation11], 256
        $region84: #{untied_gsn_forward.1} parent=63 // pred_fallthru
          _
        // Predicated region
        $region85: #{untied_gsn_forward.1} parent=63 // pred_check
          %p570 = pneg %p198
        $region86: #{untied_gsn_forward.1} parent=63 // pred_check_branch
          %572 = sbr.rel (%p570) target = $region88
        $region87: #{untied_gsn_forward.1} parent=63 // pred_region
          %573 = dma.done [#allocation14], 256
        $region88: #{untied_gsn_forward.1} parent=63 // pred_fallthru
          _
        // Predicated region
        $region89: #{untied_gsn_forward.1} parent=63 // pred_check
          %p574 = pneg %p219
        $region90: #{untied_gsn_forward.1} parent=63 // pred_check_branch
          %576 = sbr.rel (%p574) target = $region92
        $region91: #{untied_gsn_forward.1} parent=63 // pred_region
          %577 = dma.done [#allocation14], 512
        $region92: #{untied_gsn_forward.1} parent=63 // pred_fallthru
          _
        // Predicated region
        $region93: #{untied_gsn_forward.1} parent=63 // pred_check
          %p578 = pneg %p240
        $region94: #{untied_gsn_forward.1} parent=63 // pred_check_branch
          %580 = sbr.rel (%p578) target = $region96
        $region95: #{untied_gsn_forward.1} parent=63 // pred_region
          %581 = dma.done [#allocation17], 512
        $region96: #{untied_gsn_forward.1} parent=63 // pred_fallthru
          _
        // Predicated region
        $region97: #{untied_gsn_forward.1} parent=63 // pred_check
          %p582 = pneg %p261
        $region98: #{untied_gsn_forward.1} parent=63 // pred_check_branch
          %584 = sbr.rel (%p582) target = $region100
        $region99: #{untied_gsn_forward.1} parent=63 // pred_region
          %585 = dma.done [#allocation17], 16
        $region100: #{untied_gsn_forward.1} parent=63 // pred_fallthru
          _
        // Predicated region
        $region101: #{untied_gsn_forward.1} parent=63 // pred_check
          %p586 = pneg %p282
        $region102: #{untied_gsn_forward.1} parent=63 // pred_check_branch
          %588 = sbr.rel (%p586) target = $region104
        $region103: #{untied_gsn_forward.1} parent=63 // pred_region
          %589 = dma.done [#allocation20], 16
        $region104: #{untied_gsn_forward.1} parent=63 // pred_fallthru
          _
        // Predicated region
        $region105: #{untied_gsn_forward.1} parent=63 // pred_check
          %p590 = pneg %p303
        $region106: #{untied_gsn_forward.1} parent=63 // pred_check_branch
          %592 = sbr.rel (%p590) target = $region108
        $region107: #{untied_gsn_forward.1} parent=63 // pred_region
          %593 = dma.done [#allocation20], 16
        $region108: #{untied_gsn_forward.1} parent=63 // pred_fallthru
          _
        %s594 = sand.u32 %s59, 1
        %s595 = scalar_lea.sflag [#allocation5], %s594
        %s596 = sand.u32 %s59, 1
        %s597 = smul.addr %s596, 32
        %s598 = scalar_lea.vmem [#allocation4], %s597
        %p599 = pneg %p72
        %p600 = pneg %p69
        %s601 = sand.u32 %s37, 1
        %s602 = scalar_lea.sflag [#allocation8], %s601
        %s603 = sand.u32 %s87, 1
        %s604 = smul.addr %s603, 32
        %s605 = scalar_lea.vmem [#allocation7], %s604
        %p606 = pneg %p100
        %p607 = pneg %p97
        %s608 = sand.u32 %s37, 1
        %s609 = scalar_lea.sflag [#allocation8], %s608
        %s610 = sand.u32 %s115, 1
        %s611 = smul.addr %s610, 32
        %s612 = scalar_lea.vmem [#allocation9], %s611
        %p613 = pneg %p128
        %p614 = pneg %p125
        %s615 = sand.u32 %s37, 1
        %s616 = scalar_lea.sflag [#allocation11], %s615
        %s617 = sand.u32 %s143, 1
        %s618 = smul.addr %s617, 32
        %s619 = scalar_lea.vmem [#allocation10], %s618
        %p620 = pneg %p156
        %p621 = pneg %p153
        %p622 = pneg %p177
        %p623 = pneg %p174
        %p624 = pneg %p198
        %p625 = pneg %p195
        %p626 = pneg %p219
        %p627 = pneg %p216
        %p628 = pneg %p240
        %p629 = pneg %p237
        %p630 = pneg %p261
        %p631 = pneg %p258
        %p632 = pneg %p282
        %p633 = pneg %p279
        %p634 = pneg %p303
        %p635 = pneg %p300
        %p636 = pneg %p331
        %p637 = pneg %p328
        %s638 = sand.u32 %s318, 1
        %s639 = scalar_lea.sflag [#allocation6], %s638
        %s640 = sand.u32 %s318, 1
        %s641 = smul.addr %s640, 32
        %s642 = scalar_lea.vmem [#allocation22], %s641
        %s643 = smul.u32 4, %s42
        %s644 = smul.u32 4, %s42
        %s645 = smul.u32 4, %s42
        %s646 = smul.u32 4, %s42
        %s647 = smul.u32 4, %s42
        %p649 = scmp.eq.s32.totalorder %s42, 0
        // Predicated region
        $region109: #{untied_gsn_forward.1} parent=63 // pred_check
          %p650 = pneg %p649
        $region110: #{untied_gsn_forward.1} parent=63 // pred_check_branch
          %652 = sbr.rel (%p650) target = $region112
        $region111: #{untied_gsn_forward.1} parent=63 // pred_region
          %vm653 = vcmask 261120
          %654 = vst.msk [vmem:[#allocation2] sm:$0xff] %vm653, 0.0
        $region112: #{untied_gsn_forward.1} parent=63 // pred_fallthru
          _
        %v655 = vld [vmem:[%s534] sm:$0xff]
        %v656 = vld [vmem:[%s534 + $0x8] sm:$0xff]
        %v657 = vld [vmem:[%s534 + $0x10] sm:$0xff]
        %v658 = vld [vmem:[%s534 + $0x18] sm:$0xff]
        %v659 = vld [vmem:[%s552] sm:$0xff]
        %v660 = vld [vmem:[%s552 + $0x8] sm:$0xff]
        %v661 = vld [vmem:[%s552 + $0x10] sm:$0xff]
        %v662 = vld [vmem:[%s552 + $0x18] sm:$0xff]
        %vm663 = vcmp.lt.f32.partialorder %v659, 0.5
        %vm664 = vcmp.lt.f32.partialorder %v660, 0.5
        %vm665 = vcmp.lt.f32.partialorder %v661, 0.5
        %vm666 = vcmp.lt.f32.partialorder %v662, 0.5
        %v667 = vsel %vm663, 1, 0
        %v668 = vsel %vm664, 1, 0
        %v669 = vsel %vm665, 1, 0
        %v670 = vsel %vm666, 1, 0
        %v671 = vcvt.s32.f32 %v667
        %v672 = vcvt.s32.f32 %v668
        %v673 = vcvt.s32.f32 %v669
        %v674 = vcvt.s32.f32 %v670
        %v675 = vld [vmem:[%s543] sm:$0xff]
        %v676 = vld [vmem:[%s543 + $0x8] sm:$0xff]
        %v677 = vld [vmem:[%s543 + $0x10] sm:$0xff]
        %v678 = vld [vmem:[%s543 + $0x18] sm:$0xff]
        %vm679 = vcmp.lt.f32.partialorder %v675, 0.4
        %vm680 = vcmp.lt.f32.partialorder %v676, 0.4
        %vm681 = vcmp.lt.f32.partialorder %v677, 0.4
        %vm682 = vcmp.lt.f32.partialorder %v678, 0.4
        %v683 = vsel %vm679, %v671, %v655
        %v684 = vsel %vm680, %v672, %v656
        %v685 = vsel %vm681, %v673, %v657
        %v686 = vsel %vm682, %v674, %v658
        %v687 = vpack.c.bf16 %v684, %v683
        %v688 = vpack.c.bf16 %v686, %v685
        %v689 = vld [vmem:[#allocation12] sm:$0xf]
        %v690 = vld [vmem:[#allocation12 + $0x4] sm:$0xf]
        %v691 = vld [vmem:[#allocation12 + $0x8] sm:$0xf]
        %v692 = vld [vmem:[#allocation12 + $0xc] sm:$0xf]
        %v693 = vld [vmem:[#allocation18] sm:$0x1]
        %v695 = vlaneseq
        %v696 = vshrl.u32 %v695, 7
        %v697 = vsub.s32 0, %v696
        %v698 = vrot.slane %v693, %v697
        %v704 = vunpack.c.l.b16 %v689
        %v705 = vunpack.c.l.b16 %v690
        %v706 = vunpack.c.l.b16 %v691
        %v707 = vunpack.c.l.b16 %v692
        %v708 = vpack.c.b16 %v705, %v704
        %v709 = vpack.c.b16 %v707, %v706
        %vm712 = vcmask 261120
        %v714 = vsel %vm712, %v687, 0
        %v717 = vsel %vm712, %v688, 0
        %719 = vmatprep.subr.bf16.mxu0 0
        %720 = vmatpush1.bf16.msra.mxu0 %v708
        %721 = vmatprep.subr.bf16.mxu0 0
        %722 = vmatpush1.bf16.msra.mxu0 %v709
        %723 = vmatprep.subr.bf16.mxu0 0
        %724 = vmatpush1.bf16.msra.mxu0 0
        %725 = vmatprep.subr.bf16.mxu0 0
        %726 = vmatpush1.bf16.msra.mxu0 0
        %727 = vmatprep.subr.bf16.mxu0 0
        %728 = vmatpush1.bf16.msra.mxu0 0
        %729 = vmatprep.subr.bf16.mxu0 0
        %730 = vmatpush1.bf16.msra.mxu0 0
        %731 = vmatprep.subr.bf16.mxu0 0
        %732 = vmatpush1.bf16.msra.mxu0 0
        %733 = vmatprep.subr.bf16.mxu0 0
        %734 = vmatpush1.bf16.msra.mxu0 0
        %735 = vmatprep.subr.bf16.mxu0 0
        %736 = vmatpush1.bf16.msra.mxu0 0
        %737 = vmatprep.subr.bf16.mxu0 0
        %738 = vmatpush1.bf16.msra.mxu0 0
        %739 = vmatprep.subr.bf16.mxu0 0
        %740 = vmatpush1.bf16.msra.mxu0 0
        %741 = vmatprep.subr.bf16.mxu0 0
        %742 = vmatpush1.bf16.msra.mxu0 0
        %743 = vmatprep.subr.bf16.mxu0 0
        %744 = vmatpush1.bf16.msra.mxu0 0
        %745 = vmatprep.subr.bf16.mxu0 0
        %746 = vmatpush1.bf16.msra.mxu0 0
        %747 = vmatprep.subr.bf16.mxu0 0
        %748 = vmatpush1.bf16.msra.mxu0 0
        %749 = vmatprep.subr.bf16.mxu0 0
        %750 = vmatpush1.bf16.msra.mxu0 0
        %751 = vmatprep.mubr.bf16.mxu0 0
        %752 = vmatmul.mubr.bf16.gmra.mrb[0].mxu0 %v714
        %v753 = vpop.f32.mrb[0].mxu0
        %v754 = vadd.f32 %v698, %v753
        %v755 = vpop.f32.mrb[0].mxu0
        %v756 = vpop.f32.mrb[0].mxu0
        %v757 = vadd.f32 %v698, %v756
        %v758 = vpop.f32.mrb[0].mxu0
        %759 = vmatprep.mubr.bf16.mxu0 0
        %760 = vmatmul.mubr.bf16.gmra.mrb[0].mxu0 %v717
        %v761 = vpop.f32.mrb[0].mxu0
        %v762 = vadd.f32 %v698, %v761
        %v763 = vpop.f32.mrb[0].mxu0
        %v764 = vpop.f32.mrb[0].mxu0
        %v765 = vadd.f32 %v698, %v764
        %v766 = vpop.f32.mrb[0].mxu0
        %767 = vdwg.mxu0
        %vm768 = vcmask 523264
        %769 = vst.msk [vmem:[#allocation3] sm:$0xff] %vm768, %v754
        %770 = vst.msk [vmem:[#allocation3 + $0x8] sm:$0xff] %vm768, %v757
        %771 = vst.msk [vmem:[#allocation3 + $0x10] sm:$0xff] %vm768, %v762
        %772 = vst.msk [vmem:[#allocation3 + $0x18] sm:$0xff] %vm768, %v765
        %v773 = vld [vmem:[#allocation13] sm:$0xf]
        %v774 = vld [vmem:[#allocation13 + $0x4] sm:$0xf]
        %v775 = vld [vmem:[#allocation13 + $0x8] sm:$0xf]
        %v776 = vld [vmem:[#allocation13 + $0xc] sm:$0xf]
        %v777 = vld [vmem:[#allocation15] sm:$0xf]
        %v778 = vld [vmem:[#allocation15 + $0x4] sm:$0xf]
        %v779 = vld [vmem:[#allocation15 + $0x8] sm:$0xf]
        %v780 = vld [vmem:[#allocation15 + $0xc] sm:$0xf]
        %v781 = vld [vmem:[#allocation15 + $0x10] sm:$0xf]
        %v782 = vld [vmem:[#allocation15 + $0x14] sm:$0xf]
        %v783 = vld [vmem:[#allocation15 + $0x18] sm:$0xf]
        %v784 = vld [vmem:[#allocation15 + $0x1c] sm:$0xf]
        %v785 = vld [vmem:[#allocation16] sm:$0xf]
        %v786 = vld [vmem:[#allocation16 + $0x4] sm:$0xf]
        %v787 = vld [vmem:[#allocation16 + $0x8] sm:$0xf]
        %v788 = vld [vmem:[#allocation16 + $0xc] sm:$0xf]
        %v789 = vld [vmem:[#allocation16 + $0x10] sm:$0xf]
        %v790 = vld [vmem:[#allocation16 + $0x14] sm:$0xf]
        %v791 = vld [vmem:[#allocation16 + $0x18] sm:$0xf]
        %v792 = vld [vmem:[#allocation16 + $0x1c] sm:$0xf]
        %v793 = vld [vmem:[#allocation19] sm:$0x1]
        %v795 = vlaneseq
        %v796 = vshrl.u32 %v795, 7
        %v797 = vsub.s32 0, %v796
        %v798 = vrot.slane %v793, %v797
        %v800 = vld [vmem:[#allocation21] sm:$0x1]
        %v802 = vlaneseq
        %v803 = vshrl.u32 %v802, 7
        %v804 = vsub.s32 0, %v803
        %v805 = vrot.slane %v800, %v804
        %v807 = vld [vmem:[#allocation2] sm:$0xff]
        %v808 = vld [vmem:[#allocation3] sm:$0xff]
        %v809 = vpack.c.bf16 %v807, %v807
        %v814 = vunpack.c.l.b16 %v773
        %v815 = vunpack.c.l.b16 %v774
        %v816 = vunpack.c.l.b16 %v775
        %v817 = vunpack.c.l.b16 %v776
        %v818 = vpack.c.b16 %v815, %v814
        %v819 = vpack.c.b16 %v817, %v816
        %v823 = vsel %vm712, %v809, 0
        %825 = vmatprep.subr.bf16.mxu0 0
        %826 = vmatpush1.bf16.msra.mxu0 %v818
        %827 = vmatprep.subr.bf16.mxu0 0
        %828 = vmatpush1.bf16.msra.mxu0 %v819
        %829 = vmatprep.subr.bf16.mxu0 0
        %830 = vmatpush1.bf16.msra.mxu0 0
        %831 = vmatprep.subr.bf16.mxu0 0
        %832 = vmatpush1.bf16.msra.mxu0 0
        %833 = vmatprep.subr.bf16.mxu0 0
        %834 = vmatpush1.bf16.msra.mxu0 0
        %835 = vmatprep.subr.bf16.mxu0 0
        %836 = vmatpush1.bf16.msra.mxu0 0
        %837 = vmatprep.subr.bf16.mxu0 0
        %838 = vmatpush1.bf16.msra.mxu0 0
        %839 = vmatprep.subr.bf16.mxu0 0
        %840 = vmatpush1.bf16.msra.mxu0 0
        %841 = vmatprep.subr.bf16.mxu0 0
        %842 = vmatpush1.bf16.msra.mxu0 0
        %843 = vmatprep.subr.bf16.mxu0 0
        %844 = vmatpush1.bf16.msra.mxu0 0
        %845 = vmatprep.subr.bf16.mxu0 0
        %846 = vmatpush1.bf16.msra.mxu0 0
        %847 = vmatprep.subr.bf16.mxu0 0
        %848 = vmatpush1.bf16.msra.mxu0 0
        %849 = vmatprep.subr.bf16.mxu0 0
        %850 = vmatpush1.bf16.msra.mxu0 0
        %851 = vmatprep.subr.bf16.mxu0 0
        %852 = vmatpush1.bf16.msra.mxu0 0
        %853 = vmatprep.subr.bf16.mxu0 0
        %854 = vmatpush1.bf16.msra.mxu0 0
        %855 = vmatprep.subr.bf16.mxu0 0
        %856 = vmatpush1.bf16.msra.mxu0 0
        %857 = vmatprep.mubr.bf16.mxu0 0
        %858 = vmatmul.mubr.bf16.gmra.mrb[0].mxu0 %v823
        %v859 = vpop.f32.mrb[0].mxu0
        %v860 = vadd.f32 0.0, %v859
        %v861 = vpop.f32.mrb[0].mxu0
        %v862 = vpop.f32.mrb[0].mxu0
        %v863 = vpop.f32.mrb[0].mxu0
        %864 = vdwg.mxu0
        %v865 = vadd.f32 %v808, %v860
        %v866 = vmax.f32 %v865, 0.0
        %v867 = vpack.c.bf16 %v866, %v866
        %v876 = vunpack.c.l.b16 %v777
        %v877 = vunpack.c.l.b16 %v778
        %v878 = vunpack.c.l.b16 %v779
        %v879 = vunpack.c.l.b16 %v780
        %v880 = vunpack.c.l.b16 %v781
        %v881 = vunpack.c.l.b16 %v782
        %v882 = vunpack.c.l.b16 %v783
        %v883 = vunpack.c.l.b16 %v784
        %v884 = vpack.c.b16 %v877, %v876
        %v885 = vpack.c.b16 %v879, %v878
        %v886 = vpack.c.b16 %v881, %v880
        %v887 = vpack.c.b16 %v883, %v882
        %v893 = vsel %vm768, %v867, 0
        %895 = vmatprep.subr.bf16.mxu0 0
        %896 = vmatpush1.bf16.msra.mxu0 %v884
        %897 = vmatprep.subr.bf16.mxu0 0
        %898 = vmatpush1.bf16.msra.mxu0 %v885
        %899 = vmatprep.subr.bf16.mxu0 0
        %900 = vmatpush1.bf16.msra.mxu0 %v886
        %901 = vmatprep.subr.bf16.mxu0 0
        %902 = vmatpush1.bf16.msra.mxu0 %v887
        %903 = vmatprep.subr.bf16.mxu0 0
        %904 = vmatpush1.bf16.msra.mxu0 0
        %905 = vmatprep.subr.bf16.mxu0 0
        %906 = vmatpush1.bf16.msra.mxu0 0
        %907 = vmatprep.subr.bf16.mxu0 0
        %908 = vmatpush1.bf16.msra.mxu0 0
        %909 = vmatprep.subr.bf16.mxu0 0
        %910 = vmatpush1.bf16.msra.mxu0 0
        %911 = vmatprep.subr.bf16.mxu0 0
        %912 = vmatpush1.bf16.msra.mxu0 0
        %913 = vmatprep.subr.bf16.mxu0 0
        %914 = vmatpush1.bf16.msra.mxu0 0
        %915 = vmatprep.subr.bf16.mxu0 0
        %916 = vmatpush1.bf16.msra.mxu0 0
        %917 = vmatprep.subr.bf16.mxu0 0
        %918 = vmatpush1.bf16.msra.mxu0 0
        %919 = vmatprep.subr.bf16.mxu0 0
        %920 = vmatpush1.bf16.msra.mxu0 0
        %921 = vmatprep.subr.bf16.mxu0 0
        %922 = vmatpush1.bf16.msra.mxu0 0
        %923 = vmatprep.subr.bf16.mxu0 0
        %924 = vmatpush1.bf16.msra.mxu0 0
        %925 = vmatprep.subr.bf16.mxu0 0
        %926 = vmatpush1.bf16.msra.mxu0 0
        %927 = vmatprep.mubr.bf16.mxu0 0
        %928 = vmatmul.mubr.bf16.gmra.mrb[0].mxu0 %v893
        %v929 = vpop.f32.mrb[0].mxu0
        %v930 = vadd.f32 %v798, %v929
        %v931 = vpop.f32.mrb[0].mxu0
        %v932 = vpop.f32.mrb[0].mxu0
        %v933 = vpop.f32.mrb[0].mxu0
        %934 = vdwg.mxu0
        %v943 = vunpack.c.l.b16 %v785
        %v944 = vunpack.c.l.b16 %v786
        %v945 = vunpack.c.l.b16 %v787
        %v946 = vunpack.c.l.b16 %v788
        %v947 = vunpack.c.l.b16 %v789
        %v948 = vunpack.c.l.b16 %v790
        %v949 = vunpack.c.l.b16 %v791
        %v950 = vunpack.c.l.b16 %v792
        %v951 = vpack.c.b16 %v944, %v943
        %v952 = vpack.c.b16 %v946, %v945
        %v953 = vpack.c.b16 %v948, %v947
        %v954 = vpack.c.b16 %v950, %v949
        %959 = vmatprep.subr.bf16.mxu0 0
        %960 = vmatpush1.bf16.msra.mxu0 %v951
        %961 = vmatprep.subr.bf16.mxu0 0
        %962 = vmatpush1.bf16.msra.mxu0 %v952
        %963 = vmatprep.subr.bf16.mxu0 0
        %964 = vmatpush1.bf16.msra.mxu0 %v953
        %965 = vmatprep.subr.bf16.mxu0 0
        %966 = vmatpush1.bf16.msra.mxu0 %v954
        %967 = vmatprep.subr.bf16.mxu0 0
        %968 = vmatpush1.bf16.msra.mxu0 0
        %969 = vmatprep.subr.bf16.mxu0 0
        %970 = vmatpush1.bf16.msra.mxu0 0
        %971 = vmatprep.subr.bf16.mxu0 0
        %972 = vmatpush1.bf16.msra.mxu0 0
        %973 = vmatprep.subr.bf16.mxu0 0
        %974 = vmatpush1.bf16.msra.mxu0 0
        %975 = vmatprep.subr.bf16.mxu0 0
        %976 = vmatpush1.bf16.msra.mxu0 0
        %977 = vmatprep.subr.bf16.mxu0 0
        %978 = vmatpush1.bf16.msra.mxu0 0
        %979 = vmatprep.subr.bf16.mxu0 0
        %980 = vmatpush1.bf16.msra.mxu0 0
        %981 = vmatprep.subr.bf16.mxu0 0
        %982 = vmatpush1.bf16.msra.mxu0 0
        %983 = vmatprep.subr.bf16.mxu0 0
        %984 = vmatpush1.bf16.msra.mxu0 0
        %985 = vmatprep.subr.bf16.mxu0 0
        %986 = vmatpush1.bf16.msra.mxu0 0
        %987 = vmatprep.subr.bf16.mxu0 0
        %988 = vmatpush1.bf16.msra.mxu0 0
        %989 = vmatprep.subr.bf16.mxu0 0
        %990 = vmatpush1.bf16.msra.mxu0 0
        %991 = vmatprep.mubr.bf16.mxu0 0
        %992 = vmatmul.mubr.bf16.gmra.mrb[0].mxu0 %v893
        %v993 = vpop.f32.mrb[0].mxu0
        %v994 = vadd.f32 %v805, %v993
        %v995 = vpop.f32.mrb[0].mxu0
        %v996 = vpop.f32.mrb[0].mxu0
        %v997 = vpop.f32.mrb[0].mxu0
        %998 = vdwg.mxu0
        %v999 = vxor.u32 %v994, 2147483648
        %v1000 = vmul.f32 %v999, 1.442695
        %v1001 = vpow.pop %v1000
        %v1002 = vadd.f32 %v1001, 1.0
        %v1003 = vrcp.pop %v1002
        %v1004 = vmul.f32 1.0, %v1003
        %1005 = vst.msk [vmem:[%s642] sm:$0xff] %vm712, %v1004
        %v1006 = vmax.f32 %v930, 0.0
        %v1007 = vld [vmem:[%s561] sm:$0xff]
        %v1008 = vmul.f32 %v1007, 2.0
        %v1009 = vadd.f32 %v1006, %v1008
        %s1010 = scalar_lea.vmem [#allocation3], 8
        %v1011 = vld [vmem:[%s1010] sm:$0xff]
        %v1012 = vpack.c.bf16 %v1009, %v1009
        %v1014 = vsel %vm712, %v1012, 0
        %1016 = vmatprep.subr.bf16.mxu0 0
        %1017 = vmatpush1.bf16.msra.mxu0 %v818
        %1018 = vmatprep.subr.bf16.mxu0 0
        %1019 = vmatpush1.bf16.msra.mxu0 %v819
        %1020 = vmatprep.subr.bf16.mxu0 0
        %1021 = vmatpush1.bf16.msra.mxu0 0
        %1022 = vmatprep.subr.bf16.mxu0 0
        %1023 = vmatpush1.bf16.msra.mxu0 0
        %1024 = vmatprep.subr.bf16.mxu0 0
        %1025 = vmatpush1.bf16.msra.mxu0 0
        %1026 = vmatprep.subr.bf16.mxu0 0
        %1027 = vmatpush1.bf16.msra.mxu0 0
        %1028 = vmatprep.subr.bf16.mxu0 0
        %1029 = vmatpush1.bf16.msra.mxu0 0
        %1030 = vmatprep.subr.bf16.mxu0 0
        %1031 = vmatpush1.bf16.msra.mxu0 0
        %1032 = vmatprep.subr.bf16.mxu0 0
        %1033 = vmatpush1.bf16.msra.mxu0 0
        %1034 = vmatprep.subr.bf16.mxu0 0
        %1035 = vmatpush1.bf16.msra.mxu0 0
        %1036 = vmatprep.subr.bf16.mxu0 0
        %1037 = vmatpush1.bf16.msra.mxu0 0
        %1038 = vmatprep.subr.bf16.mxu0 0
        %1039 = vmatpush1.bf16.msra.mxu0 0
        %1040 = vmatprep.subr.bf16.mxu0 0
        %1041 = vmatpush1.bf16.msra.mxu0 0
        %1042 = vmatprep.subr.bf16.mxu0 0
        %1043 = vmatpush1.bf16.msra.mxu0 0
        %1044 = vmatprep.subr.bf16.mxu0 0
        %1045 = vmatpush1.bf16.msra.mxu0 0
        %1046 = vmatprep.subr.bf16.mxu0 0
        %1047 = vmatpush1.bf16.msra.mxu0 0
        %1048 = vmatprep.mubr.bf16.mxu0 0
        %1049 = vmatmul.mubr.bf16.gmra.mrb[0].mxu0 %v1014
        %v1050 = vpop.f32.mrb[0].mxu0
        %v1051 = vadd.f32 0.0, %v1050
        %v1052 = vpop.f32.mrb[0].mxu0
        %v1053 = vpop.f32.mrb[0].mxu0
        %v1054 = vpop.f32.mrb[0].mxu0
        %1055 = vdwg.mxu0
        %v1056 = vadd.f32 %v1011, %v1051
        %v1057 = vmax.f32 %v1056, 0.0
        %v1058 = vpack.c.bf16 %v1057, %v1057
        %v1060 = vsel %vm768, %v1058, 0
        %1062 = vmatprep.subr.bf16.mxu0 0
        %1063 = vmatpush1.bf16.msra.mxu0 %v884
        %1064 = vmatprep.subr.bf16.mxu0 0
        %1065 = vmatpush1.bf16.msra.mxu0 %v885
        %1066 = vmatprep.subr.bf16.mxu0 0
        %1067 = vmatpush1.bf16.msra.mxu0 %v886
        %1068 = vmatprep.subr.bf16.mxu0 0
        %1069 = vmatpush1.bf16.msra.mxu0 %v887
        %1070 = vmatprep.subr.bf16.mxu0 0
        %1071 = vmatpush1.bf16.msra.mxu0 0
        %1072 = vmatprep.subr.bf16.mxu0 0
        %1073 = vmatpush1.bf16.msra.mxu0 0
        %1074 = vmatprep.subr.bf16.mxu0 0
        %1075 = vmatpush1.bf16.msra.mxu0 0
        %1076 = vmatprep.subr.bf16.mxu0 0
        %1077 = vmatpush1.bf16.msra.mxu0 0
        %1078 = vmatprep.subr.bf16.mxu0 0
        %1079 = vmatpush1.bf16.msra.mxu0 0
        %1080 = vmatprep.subr.bf16.mxu0 0
        %1081 = vmatpush1.bf16.msra.mxu0 0
        %1082 = vmatprep.subr.bf16.mxu0 0
        %1083 = vmatpush1.bf16.msra.mxu0 0
        %1084 = vmatprep.subr.bf16.mxu0 0
        %1085 = vmatpush1.bf16.msra.mxu0 0
        %1086 = vmatprep.subr.bf16.mxu0 0
        %1087 = vmatpush1.bf16.msra.mxu0 0
        %1088 = vmatprep.subr.bf16.mxu0 0
        %1089 = vmatpush1.bf16.msra.mxu0 0
        %1090 = vmatprep.subr.bf16.mxu0 0
        %1091 = vmatpush1.bf16.msra.mxu0 0
        %1092 = vmatprep.subr.bf16.mxu0 0
        %1093 = vmatpush1.bf16.msra.mxu0 0
        %1094 = vmatprep.mubr.bf16.mxu0 0
        %1095 = vmatmul.mubr.bf16.gmra.mrb[0].mxu0 %v1060
        %v1096 = vpop.f32.mrb[0].mxu0
        %v1097 = vadd.f32 %v798, %v1096
        %v1098 = vpop.f32.mrb[0].mxu0
        %v1099 = vpop.f32.mrb[0].mxu0
        %v1100 = vpop.f32.mrb[0].mxu0
        %1101 = vdwg.mxu0
        %1102 = vmatprep.subr.bf16.mxu0 0
        %1103 = vmatpush1.bf16.msra.mxu0 %v951
        %1104 = vmatprep.subr.bf16.mxu0 0
        %1105 = vmatpush1.bf16.msra.mxu0 %v952
        %1106 = vmatprep.subr.bf16.mxu0 0
        %1107 = vmatpush1.bf16.msra.mxu0 %v953
        %1108 = vmatprep.subr.bf16.mxu0 0
        %1109 = vmatpush1.bf16.msra.mxu0 %v954
        %1110 = vmatprep.subr.bf16.mxu0 0
        %1111 = vmatpush1.bf16.msra.mxu0 0
        %1112 = vmatprep.subr.bf16.mxu0 0
        %1113 = vmatpush1.bf16.msra.mxu0 0
        %1114 = vmatprep.subr.bf16.mxu0 0
        %1115 = vmatpush1.bf16.msra.mxu0 0
        %1116 = vmatprep.subr.bf16.mxu0 0
        %1117 = vmatpush1.bf16.msra.mxu0 0
        %1118 = vmatprep.subr.bf16.mxu0 0
        %1119 = vmatpush1.bf16.msra.mxu0 0
        %1120 = vmatprep.subr.bf16.mxu0 0
        %1121 = vmatpush1.bf16.msra.mxu0 0
        %1122 = vmatprep.subr.bf16.mxu0 0
        %1123 = vmatpush1.bf16.msra.mxu0 0
        %1124 = vmatprep.subr.bf16.mxu0 0
        %1125 = vmatpush1.bf16.msra.mxu0 0
        %1126 = vmatprep.subr.bf16.mxu0 0
        %1127 = vmatpush1.bf16.msra.mxu0 0
        %1128 = vmatprep.subr.bf16.mxu0 0
        %1129 = vmatpush1.bf16.msra.mxu0 0
        %1130 = vmatprep.subr.bf16.mxu0 0
        %1131 = vmatpush1.bf16.msra.mxu0 0
        %1132 = vmatprep.subr.bf16.mxu0 0
        %1133 = vmatpush1.bf16.msra.mxu0 0
        %1134 = vmatprep.mubr.bf16.mxu0 0
        %1135 = vmatmul.mubr.bf16.gmra.mrb[0].mxu0 %v1060
        %v1136 = vpop.f32.mrb[0].mxu0
        %v1137 = vadd.f32 %v805, %v1136
        %v1138 = vpop.f32.mrb[0].mxu0
        %v1139 = vpop.f32.mrb[0].mxu0
        %v1140 = vpop.f32.mrb[0].mxu0
        %1141 = vdwg.mxu0
        %v1142 = vxor.u32 %v1137, 2147483648
        %v1143 = vmul.f32 %v1142, 1.442695
        %v1144 = vpow.pop %v1143
        %v1145 = vadd.f32 %v1144, 1.0
        %v1146 = vrcp.pop %v1145
        %v1147 = vmul.f32 1.0, %v1146
        %s1148 = scalar_lea.vmem %s642, 8 [#allocation22]
        %1149 = vst.msk [vmem:[%s1148] sm:$0xff] %vm712, %v1147
        %v1150 = vmax.f32 %v1097, 0.0
        %s1151 = scalar_lea.vmem %s561, 8 [#allocation10]
        %v1152 = vld [vmem:[%s1151] sm:$0xff]
        %v1153 = vmul.f32 %v1152, 2.0
        %v1154 = vadd.f32 %v1150, %v1153
        %s1155 = scalar_lea.vmem [#allocation3], 16
        %v1156 = vld [vmem:[%s1155] sm:$0xff]
        %v1157 = vpack.c.bf16 %v1154, %v1154
        %v1159 = vsel %vm712, %v1157, 0
        %1161 = vmatprep.subr.bf16.mxu0 0
        %1162 = vmatpush1.bf16.msra.mxu0 %v818
        %1163 = vmatprep.subr.bf16.mxu0 0
        %1164 = vmatpush1.bf16.msra.mxu0 %v819
        %1165 = vmatprep.subr.bf16.mxu0 0
        %1166 = vmatpush1.bf16.msra.mxu0 0
        %1167 = vmatprep.subr.bf16.mxu0 0
        %1168 = vmatpush1.bf16.msra.mxu0 0
        %1169 = vmatprep.subr.bf16.mxu0 0
        %1170 = vmatpush1.bf16.msra.mxu0 0
        %1171 = vmatprep.subr.bf16.mxu0 0
        %1172 = vmatpush1.bf16.msra.mxu0 0
        %1173 = vmatprep.subr.bf16.mxu0 0
        %1174 = vmatpush1.bf16.msra.mxu0 0
        %1175 = vmatprep.subr.bf16.mxu0 0
        %1176 = vmatpush1.bf16.msra.mxu0 0
        %1177 = vmatprep.subr.bf16.mxu0 0
        %1178 = vmatpush1.bf16.msra.mxu0 0
        %1179 = vmatprep.subr.bf16.mxu0 0
        %1180 = vmatpush1.bf16.msra.mxu0 0
        %1181 = vmatprep.subr.bf16.mxu0 0
        %1182 = vmatpush1.bf16.msra.mxu0 0
        %1183 = vmatprep.subr.bf16.mxu0 0
        %1184 = vmatpush1.bf16.msra.mxu0 0
        %1185 = vmatprep.subr.bf16.mxu0 0
        %1186 = vmatpush1.bf16.msra.mxu0 0
        %1187 = vmatprep.subr.bf16.mxu0 0
        %1188 = vmatpush1.bf16.msra.mxu0 0
        %1189 = vmatprep.subr.bf16.mxu0 0
        %1190 = vmatpush1.bf16.msra.mxu0 0
        %1191 = vmatprep.subr.bf16.mxu0 0
        %1192 = vmatpush1.bf16.msra.mxu0 0
        %1193 = vmatprep.mubr.bf16.mxu0 0
        %1194 = vmatmul.mubr.bf16.gmra.mrb[0].mxu0 %v1159
        %v1195 = vpop.f32.mrb[0].mxu0
        %v1196 = vadd.f32 0.0, %v1195
        %v1197 = vpop.f32.mrb[0].mxu0
        %v1198 = vpop.f32.mrb[0].mxu0
        %v1199 = vpop.f32.mrb[0].mxu0
        %1200 = vdwg.mxu0
        %v1201 = vadd.f32 %v1156, %v1196
        %v1202 = vmax.f32 %v1201, 0.0
        %v1203 = vpack.c.bf16 %v1202, %v1202
        %v1205 = vsel %vm768, %v1203, 0
        %1207 = vmatprep.subr.bf16.mxu0 0
        %1208 = vmatpush1.bf16.msra.mxu0 %v884
        %1209 = vmatprep.subr.bf16.mxu0 0
        %1210 = vmatpush1.bf16.msra.mxu0 %v885
        %1211 = vmatprep.subr.bf16.mxu0 0
        %1212 = vmatpush1.bf16.msra.mxu0 %v886
        %1213 = vmatprep.subr.bf16.mxu0 0
        %1214 = vmatpush1.bf16.msra.mxu0 %v887
        %1215 = vmatprep.subr.bf16.mxu0 0
        %1216 = vmatpush1.bf16.msra.mxu0 0
        %1217 = vmatprep.subr.bf16.mxu0 0
        %1218 = vmatpush1.bf16.msra.mxu0 0
        %1219 = vmatprep.subr.bf16.mxu0 0
        %1220 = vmatpush1.bf16.msra.mxu0 0
        %1221 = vmatprep.subr.bf16.mxu0 0
        %1222 = vmatpush1.bf16.msra.mxu0 0
        %1223 = vmatprep.subr.bf16.mxu0 0
        %1224 = vmatpush1.bf16.msra.mxu0 0
        %1225 = vmatprep.subr.bf16.mxu0 0
        %1226 = vmatpush1.bf16.msra.mxu0 0
        %1227 = vmatprep.subr.bf16.mxu0 0
        %1228 = vmatpush1.bf16.msra.mxu0 0
        %1229 = vmatprep.subr.bf16.mxu0 0
        %1230 = vmatpush1.bf16.msra.mxu0 0
        %1231 = vmatprep.subr.bf16.mxu0 0
        %1232 = vmatpush1.bf16.msra.mxu0 0
        %1233 = vmatprep.subr.bf16.mxu0 0
        %1234 = vmatpush1.bf16.msra.mxu0 0
        %1235 = vmatprep.subr.bf16.mxu0 0
        %1236 = vmatpush1.bf16.msra.mxu0 0
        %1237 = vmatprep.subr.bf16.mxu0 0
        %1238 = vmatpush1.bf16.msra.mxu0 0
        %1239 = vmatprep.mubr.bf16.mxu0 0
        %1240 = vmatmul.mubr.bf16.gmra.mrb[0].mxu0 %v1205
        %v1241 = vpop.f32.mrb[0].mxu0
        %v1242 = vadd.f32 %v798, %v1241
        %v1243 = vpop.f32.mrb[0].mxu0
        %v1244 = vpop.f32.mrb[0].mxu0
        %v1245 = vpop.f32.mrb[0].mxu0
        %1246 = vdwg.mxu0
        %1247 = vmatprep.subr.bf16.mxu0 0
        %1248 = vmatpush1.bf16.msra.mxu0 %v951
        %1249 = vmatprep.subr.bf16.mxu0 0
        %1250 = vmatpush1.bf16.msra.mxu0 %v952
        %1251 = vmatprep.subr.bf16.mxu0 0
        %1252 = vmatpush1.bf16.msra.mxu0 %v953
        %1253 = vmatprep.subr.bf16.mxu0 0
        %1254 = vmatpush1.bf16.msra.mxu0 %v954
        %1255 = vmatprep.subr.bf16.mxu0 0
        %1256 = vmatpush1.bf16.msra.mxu0 0
        %1257 = vmatprep.subr.bf16.mxu0 0
        %1258 = vmatpush1.bf16.msra.mxu0 0
        %1259 = vmatprep.subr.bf16.mxu0 0
        %1260 = vmatpush1.bf16.msra.mxu0 0
        %1261 = vmatprep.subr.bf16.mxu0 0
        %1262 = vmatpush1.bf16.msra.mxu0 0
        %1263 = vmatprep.subr.bf16.mxu0 0
        %1264 = vmatpush1.bf16.msra.mxu0 0
        %1265 = vmatprep.subr.bf16.mxu0 0
        %1266 = vmatpush1.bf16.msra.mxu0 0
        %1267 = vmatprep.subr.bf16.mxu0 0
        %1268 = vmatpush1.bf16.msra.mxu0 0
        %1269 = vmatprep.subr.bf16.mxu0 0
        %1270 = vmatpush1.bf16.msra.mxu0 0
        %1271 = vmatprep.subr.bf16.mxu0 0
        %1272 = vmatpush1.bf16.msra.mxu0 0
        %1273 = vmatprep.subr.bf16.mxu0 0
        %1274 = vmatpush1.bf16.msra.mxu0 0
        %1275 = vmatprep.subr.bf16.mxu0 0
        %1276 = vmatpush1.bf16.msra.mxu0 0
        %1277 = vmatprep.subr.bf16.mxu0 0
        %1278 = vmatpush1.bf16.msra.mxu0 0
        %1279 = vmatprep.mubr.bf16.mxu0 0
        %1280 = vmatmul.mubr.bf16.gmra.mrb[0].mxu0 %v1205
        %v1281 = vpop.f32.mrb[0].mxu0
        %v1282 = vadd.f32 %v805, %v1281
        %v1283 = vpop.f32.mrb[0].mxu0
        %v1284 = vpop.f32.mrb[0].mxu0
        %v1285 = vpop.f32.mrb[0].mxu0
        %1286 = vdwg.mxu0
        %v1287 = vxor.u32 %v1282, 2147483648
        %v1288 = vmul.f32 %v1287, 1.442695
        %v1289 = vpow.pop %v1288
        %v1290 = vadd.f32 %v1289, 1.0
        %v1291 = vrcp.pop %v1290
        %v1292 = vmul.f32 1.0, %v1291
        %s1293 = scalar_lea.vmem %s642, 16 [#allocation22]
        %1294 = vst.msk [vmem:[%s1293] sm:$0xff] %vm712, %v1292
        %v1295 = vmax.f32 %v1242, 0.0
        %s1296 = scalar_lea.vmem %s561, 16 [#allocation10]
        %v1297 = vld [vmem:[%s1296] sm:$0xff]
        %v1298 = vmul.f32 %v1297, 2.0
        %v1299 = vadd.f32 %v1295, %v1298
        %s1300 = scalar_lea.vmem [#allocation3], 24
        %v1301 = vld [vmem:[%s1300] sm:$0xff]
        %v1302 = vpack.c.bf16 %v1299, %v1299
        %v1304 = vsel %vm712, %v1302, 0
        %1306 = vmatprep.subr.bf16.mxu0 0
        %1307 = vmatpush1.bf16.msra.mxu0 %v818
        %1308 = vmatprep.subr.bf16.mxu0 0
        %1309 = vmatpush1.bf16.msra.mxu0 %v819
        %1310 = vmatprep.subr.bf16.mxu0 0
        %1311 = vmatpush1.bf16.msra.mxu0 0
        %1312 = vmatprep.subr.bf16.mxu0 0
        %1313 = vmatpush1.bf16.msra.mxu0 0
        %1314 = vmatprep.subr.bf16.mxu0 0
        %1315 = vmatpush1.bf16.msra.mxu0 0
        %1316 = vmatprep.subr.bf16.mxu0 0
        %1317 = vmatpush1.bf16.msra.mxu0 0
        %1318 = vmatprep.subr.bf16.mxu0 0
        %1319 = vmatpush1.bf16.msra.mxu0 0
        %1320 = vmatprep.subr.bf16.mxu0 0
        %1321 = vmatpush1.bf16.msra.mxu0 0
        %1322 = vmatprep.subr.bf16.mxu0 0
        %1323 = vmatpush1.bf16.msra.mxu0 0
        %1324 = vmatprep.subr.bf16.mxu0 0
        %1325 = vmatpush1.bf16.msra.mxu0 0
        %1326 = vmatprep.subr.bf16.mxu0 0
        %1327 = vmatpush1.bf16.msra.mxu0 0
        %1328 = vmatprep.subr.bf16.mxu0 0
        %1329 = vmatpush1.bf16.msra.mxu0 0
        %1330 = vmatprep.subr.bf16.mxu0 0
        %1331 = vmatpush1.bf16.msra.mxu0 0
        %1332 = vmatprep.subr.bf16.mxu0 0
        %1333 = vmatpush1.bf16.msra.mxu0 0
        %1334 = vmatprep.subr.bf16.mxu0 0
        %1335 = vmatpush1.bf16.msra.mxu0 0
        %1336 = vmatprep.subr.bf16.mxu0 0
        %1337 = vmatpush1.bf16.msra.mxu0 0
        %1338 = vmatprep.mubr.bf16.mxu0 0
        %1339 = vmatmul.mubr.bf16.gmra.mrb[0].mxu0 %v1304
        %v1340 = vpop.f32.mrb[0].mxu0
        %v1341 = vadd.f32 0.0, %v1340
        %v1342 = vpop.f32.mrb[0].mxu0
        %v1343 = vpop.f32.mrb[0].mxu0
        %v1344 = vpop.f32.mrb[0].mxu0
        %1345 = vdwg.mxu0
        %v1346 = vadd.f32 %v1301, %v1341
        %v1347 = vmax.f32 %v1346, 0.0
        %v1348 = vpack.c.bf16 %v1347, %v1347
        %v1350 = vsel %vm768, %v1348, 0
        %1352 = vmatprep.subr.bf16.mxu0 0
        %1353 = vmatpush1.bf16.msra.mxu0 %v884
        %1354 = vmatprep.subr.bf16.mxu0 0
        %1355 = vmatpush1.bf16.msra.mxu0 %v885
        %1356 = vmatprep.subr.bf16.mxu0 0
        %1357 = vmatpush1.bf16.msra.mxu0 %v886
        %1358 = vmatprep.subr.bf16.mxu0 0
        %1359 = vmatpush1.bf16.msra.mxu0 %v887
        %1360 = vmatprep.subr.bf16.mxu0 0
        %1361 = vmatpush1.bf16.msra.mxu0 0
        %1362 = vmatprep.subr.bf16.mxu0 0
        %1363 = vmatpush1.bf16.msra.mxu0 0
        %1364 = vmatprep.subr.bf16.mxu0 0
        %1365 = vmatpush1.bf16.msra.mxu0 0
        %1366 = vmatprep.subr.bf16.mxu0 0
        %1367 = vmatpush1.bf16.msra.mxu0 0
        %1368 = vmatprep.subr.bf16.mxu0 0
        %1369 = vmatpush1.bf16.msra.mxu0 0
        %1370 = vmatprep.subr.bf16.mxu0 0
        %1371 = vmatpush1.bf16.msra.mxu0 0
        %1372 = vmatprep.subr.bf16.mxu0 0
        %1373 = vmatpush1.bf16.msra.mxu0 0
        %1374 = vmatprep.subr.bf16.mxu0 0
        %1375 = vmatpush1.bf16.msra.mxu0 0
        %1376 = vmatprep.subr.bf16.mxu0 0
        %1377 = vmatpush1.bf16.msra.mxu0 0
        %1378 = vmatprep.subr.bf16.mxu0 0
        %1379 = vmatpush1.bf16.msra.mxu0 0
        %1380 = vmatprep.subr.bf16.mxu0 0
        %1381 = vmatpush1.bf16.msra.mxu0 0
        %1382 = vmatprep.subr.bf16.mxu0 0
        %1383 = vmatpush1.bf16.msra.mxu0 0
        %1384 = vmatprep.mubr.bf16.mxu0 0
        %1385 = vmatmul.mubr.bf16.gmra.mrb[0].mxu0 %v1350
        %v1386 = vpop.f32.mrb[0].mxu0
        %v1387 = vadd.f32 %v798, %v1386
        %v1388 = vpop.f32.mrb[0].mxu0
        %v1389 = vpop.f32.mrb[0].mxu0
        %v1390 = vpop.f32.mrb[0].mxu0
        %1391 = vdwg.mxu0
        %1392 = vmatprep.subr.bf16.mxu0 0
        %1393 = vmatpush1.bf16.msra.mxu0 %v951
        %1394 = vmatprep.subr.bf16.mxu0 0
        %1395 = vmatpush1.bf16.msra.mxu0 %v952
        %1396 = vmatprep.subr.bf16.mxu0 0
        %1397 = vmatpush1.bf16.msra.mxu0 %v953
        %1398 = vmatprep.subr.bf16.mxu0 0
        %1399 = vmatpush1.bf16.msra.mxu0 %v954
        %1400 = vmatprep.subr.bf16.mxu0 0
        %1401 = vmatpush1.bf16.msra.mxu0 0
        %1402 = vmatprep.subr.bf16.mxu0 0
        %1403 = vmatpush1.bf16.msra.mxu0 0
        %1404 = vmatprep.subr.bf16.mxu0 0
        %1405 = vmatpush1.bf16.msra.mxu0 0
        %1406 = vmatprep.subr.bf16.mxu0 0
        %1407 = vmatpush1.bf16.msra.mxu0 0
        %1408 = vmatprep.subr.bf16.mxu0 0
        %1409 = vmatpush1.bf16.msra.mxu0 0
        %1410 = vmatprep.subr.bf16.mxu0 0
        %1411 = vmatpush1.bf16.msra.mxu0 0
        %1412 = vmatprep.subr.bf16.mxu0 0
        %1413 = vmatpush1.bf16.msra.mxu0 0
        %1414 = vmatprep.subr.bf16.mxu0 0
        %1415 = vmatpush1.bf16.msra.mxu0 0
        %1416 = vmatprep.subr.bf16.mxu0 0
        %1417 = vmatpush1.bf16.msra.mxu0 0
        %1418 = vmatprep.subr.bf16.mxu0 0
        %1419 = vmatpush1.bf16.msra.mxu0 0
        %1420 = vmatprep.subr.bf16.mxu0 0
        %1421 = vmatpush1.bf16.msra.mxu0 0
        %1422 = vmatprep.subr.bf16.mxu0 0
        %1423 = vmatpush1.bf16.msra.mxu0 0
        %1424 = vmatprep.mubr.bf16.mxu0 0
        %1425 = vmatmul.mubr.bf16.gmra.mrb[0].mxu0 %v1350
        %v1426 = vpop.f32.mrb[0].mxu0
        %v1427 = vadd.f32 %v805, %v1426
        %v1428 = vpop.f32.mrb[0].mxu0
        %v1429 = vpop.f32.mrb[0].mxu0
        %v1430 = vpop.f32.mrb[0].mxu0
        %1431 = vdwg.mxu0
        %v1432 = vxor.u32 %v1427, 2147483648
        %v1433 = vmul.f32 %v1432, 1.442695
        %v1434 = vpow.pop %v1433
        %v1435 = vadd.f32 %v1434, 1.0
        %v1436 = vrcp.pop %v1435
        %v1437 = vmul.f32 1.0, %v1436
        %s1438 = scalar_lea.vmem %s642, 24 [#allocation22]
        %1439 = vst.msk [vmem:[%s1438] sm:$0xff] %vm712, %v1437
        %v1440 = vmax.f32 %v1387, 0.0
        %s1441 = scalar_lea.vmem %s561, 24 [#allocation10]
        %v1442 = vld [vmem:[%s1441] sm:$0xff]
        %v1443 = vmul.f32 %v1442, 2.0
        %v1444 = vadd.f32 %v1440, %v1443
        %1445 = vst.msk [vmem:[#allocation2] sm:$0xff] %vm712, %v1444
        %s1446 = sand.u32 %s318, 1
        %s1447 = scalar_lea.sflag [#allocation6], %s1446
        %s1448 = sand.u32 %s318, 1
        %s1449 = smul.addr %s1448, 32
        %s1450 = scalar_lea.vmem [#allocation22], %s1449
        // Predicated region
        $region113: #{untied_gsn_forward.1} parent=63 // pred_check
          %p1451 = pneg %p328
        $region114: #{untied_gsn_forward.1} parent=63 // pred_check_branch
          %1453 = sbr.rel (%p1451) target = $region116
        $region115: #{untied_gsn_forward.1} parent=63 // pred_region
          %s1454 = smul.u32 4, %s42
          %s1456 = ssub.s32 512, 512
          %1457 = vsyncadd %s1447, %s1456
          %s1458 = sadd.s32 %s41, %s1454
          %s1459 = smul.addr %s1458, 128
          %s1460 = scalar_lea.hbm %s11, %s1459
          %s1461 = sshll.u32 %s1450, 4
          %s1462 = int_to_ptr.vmem [resolvable:$true] %s1461
          %1467 = dma.vmem_to_hbm [thread:$0]  %s1462, 512, %s1460, %s1447, 128, 128, 8
        $region116: #{untied_gsn_forward.1} parent=63 // pred_fallthru
          _
      $region64: #{untied_gsn_forward.1} parent=5 // pred_fallthru
        _
      %p1468 = scmp.le.s32.totalorder 2, %s32
      // Predicated region
      $region117: #{untied_gsn_forward.1} parent=5 // pred_check
        %p1469 = pneg %p1468
      $region118: #{untied_gsn_forward.1} parent=5 // pred_check_branch
        %1471 = sbr.rel (%p1469) target = $region120
      $region119: #{untied_gsn_forward.1} parent=5 // pred_region
        %s1472 = ssub.s32 %s32, 2
        // Predicated region
        $region121: #{untied_gsn_forward.1} parent=119 // pred_check
          %p1473 = pneg %p334
        $region122: #{untied_gsn_forward.1} parent=119 // pred_check_branch
          %1475 = sbr.rel (%p1473) target = $region124
        $region123: #{untied_gsn_forward.1} parent=119 // pred_region
          %s1476 = sand.u32 %s319, 1
          %s1477 = scalar_lea.sflag [#allocation6], %s1476
          %s1478 = sand.u32 %s319, 1
          %s1479 = smul.addr %s1478, 32
          %s1480 = scalar_lea.vmem [#allocation22], %s1479
          %1481 = dma.done %s1477, 512
        $region124: #{untied_gsn_forward.1} parent=119 // pred_fallthru
          _
      $region120: #{untied_gsn_forward.1} parent=5 // pred_fallthru
        _
    $region6: #{untied_gsn_forward.1} parent=1 // loop_footer
      %s36 = sadd.s32 1, %s32
    $region7: #{untied_gsn_forward.1} parent=1 // loop_footer_branch
      %31 = sbr.rel target = $region3
    $region8: #{untied_gsn_forward.1} parent=1 // loop_exit
      _
    %1482 = vsyncpa [#allocation5], 1
    %s1483 = scalar_lea.sflag [#allocation5], 1
    %1484 = vsyncpa %s1483, 1
    %1485 = vsyncpa [#allocation8], 1
    %s1486 = scalar_lea.sflag [#allocation8], 1
    %1487 = vsyncpa %s1486, 1
    %1488 = vsyncpa [#allocation11], 1
    %s1489 = scalar_lea.sflag [#allocation11], 1
    %1490 = vsyncpa %s1489, 1
    %1491 = vsyncpa [#allocation14], 1
    %1492 = vsyncpa [#allocation17], 1
    %1493 = vsyncpa [#allocation20], 1
    %1494 = vsyncpa [#allocation6], 1
    %s1495 = scalar_lea.sflag [#allocation6], 1
    %1496 = vsyncpa %s1495, 1

</llo_original>
